<compile_context>
chip_gen: v5e
topology: v5e:2x2
jax: 0.10.0
libtpu: 0.0.40
codegen_flags: <defaults>
</compile_context>

<pallas_src>
import functools

import jax
import jax.numpy as jnp
from jax.experimental import pallas as pl
from jax.experimental.pallas import tpu as pltpu


def _quant_dequant(w, mx, mn, absmax, *, w_bit, zero_point, approx_recip):
    """AWQ pseudo_quantize_tensor given per-group stats.

    w: [..., G]; mx / mn / absmax: [..., 1] (stats of w along the last axis).
    approx_recip=True uses the EUP approximate reciprocal (candidate-ranking path
    only); the final quantization uses exact division.
    """
    if zero_point:
        max_int = float(2 ** w_bit - 1)
        scale = jnp.maximum(mx - mn, 1e-5) / max_int
        if approx_recip:
            inv = pl.reciprocal(scale, approx=True)
            zero = jnp.clip(jnp.round(-mn * inv), 0.0, max_int)
            q = (jnp.clip(jnp.round(w * inv) + zero, 0.0, max_int) - zero) * scale
        else:
            zero = jnp.clip(jnp.round(-mn / scale), 0.0, max_int)
            q = (jnp.clip(jnp.round(w / scale) + zero, 0.0, max_int) - zero) * scale
    else:
        max_int = float(2 ** (w_bit - 1) - 1)
        min_int = -float(2 ** (w_bit - 1))
        scale = jnp.maximum(absmax, 1e-5) / max_int
        zero = jnp.zeros_like(scale)
        if approx_recip:
            inv = pl.reciprocal(scale, approx=True)
            q = jnp.clip(jnp.round(w * inv), min_int, max_int) * scale
        else:
            q = jnp.clip(jnp.round(w / scale), min_int, max_int) * scale
    return q, scale, zero


def _awq_quant_kernel(gram_ref, w_ref, wq_ref, scale_ref, zero_ref, clip_ref, *,
                      w_bit, zero_point, do_clip, n_grid, n_shrink):
    """One grid step: a (group-tile x output-channel-tile) block of one linear.

    gram_ref:  [1, TNG, G, G]   bf16 per-group Gram matrix (X_g^T X_g / N)
    w_ref:     [1, TNG, TCO, G]      grouped weight tile
    wq_ref:    [1, TNG, TCO, G]      dequantized (pseudo-quantized) weights
    scale_ref: [1, TNG, TCO]         per-group scales        (lane axis = TCO)
    zero_ref:  [1, TNG, TCO]         per-group zero points
    clip_ref:  [1, TNG, TCO]         best clip max (|w|max if clipping disabled)
    """
    w3 = w_ref[0].astype(jnp.float32)                        # [TNG, TCO, G]
    tng, tco, _ = w3.shape

    org_mx = jnp.max(w3, axis=-1, keepdims=True)             # [TNG, TCO, 1]
    org_mn = jnp.min(w3, axis=-1, keepdims=True)
    org_absmax = jnp.maximum(org_mx, -org_mn)                # max |w| per group

    if do_clip:
        gram = gram_ref[0]                                   # [TNG, G, G] (bf16)

        def body(i_s, carry):
            min_err, best_max = carry
            # ratio computed from the loop index (no captured constant arrays).
            ratio = 1.0 - i_s.astype(jnp.float32) / float(n_grid)
            max_val = org_absmax * ratio                     # [TNG, TCO, 1]
            cand = jnp.clip(w3, -max_val, max_val)           # [TNG, TCO, G]
            # Analytic per-candidate group stats (clip is monotonic) — no
            # per-candidate cross-lane reductions.
            c_mx = jnp.clip(org_mx, -max_val, max_val)
            c_mn = jnp.clip(org_mn, -max_val, max_val)
            c_am = jnp.minimum(org_absmax, max_val)
            q_cand, _, _ = _quant_dequant(cand, c_mx, c_mn, c_am, w_bit=w_bit,
                                          zero_point=zero_point, approx_recip=True)
            diff = q_cand - w3                               # [TNG, TCO, G]
            # err_{g,c} = mean_n ((q(w)-w)_{g,c} . x_{g,n})^2
            #           = diff_{g,c,:} . Gram_g . diff_{g,c,:}^T
            tmp = jax.lax.dot_general(
                diff.astype(jnp.bfloat16), gram,
                (((2,), (1,)), ((0,), (0,))),
                preferred_element_type=jnp.float32)          # [TNG, TCO, G]
            err = jnp.sum(tmp * diff, axis=-1)               # [TNG, TCO]
            better = err < min_err                           # first occurrence wins
            min_err = jnp.where(better, err, min_err)
            best_max = jnp.where(better[..., None], max_val, best_max)
            return min_err, best_max

        min_err0 = jnp.full((tng, tco), 1e30, jnp.float32)
        _, best_max = jax.lax.fori_loop(0, n_shrink, body, (min_err0, org_absmax))

        # apply_clip + analytic stats of the clipped weights.
        w_q_in = jnp.clip(w3, -best_max, best_max)
        f_mx = jnp.clip(org_mx, -best_max, best_max)
        f_mn = jnp.clip(org_mn, -best_max, best_max)
        f_am = jnp.minimum(org_absmax, best_max)
        clip_out = best_max
    else:
        w_q_in, f_mx, f_mn, f_am = w3, org_mx, org_mn, org_absmax
        clip_out = org_absmax

    # apply_quant (pseudo_quantize_tensor, get_scale_zp=True) — exact f32 math.
    q_w, scale, zero = _quant_dequant(w_q_in, f_mx, f_mn, f_am, w_bit=w_bit,
                                      zero_point=zero_point, approx_recip=False)
    wq_ref[0] = q_w.astype(wq_ref.dtype)
    scale_ref[0] = scale[..., 0].astype(scale_ref.dtype)
    zero_ref[0] = zero[..., 0].astype(zero_ref.dtype)
    clip_ref[0] = clip_out[..., 0].astype(clip_ref.dtype)


def _choose_tco(co):
    """Output-channel tile: lane-dense (multiple of 128) when co is large."""
    if co <= 256:
        return co
    for t in (256, 128):
        if co % t == 0:
            return t
    return co  # fall back to a full-extent block


def _choose_tng(n_group):
    """Group tile: multiple of 8 (sublane rule on the scalar outputs) or full."""
    if n_group <= 8:
        return n_group
    if n_group % 8 == 0:
        return 8
    return n_group  # fall back to a full-extent block


def _quantize_linears(w, x, *, group_size, w_bit, zero_point, do_clip,
                      n_grid=20, max_shrink=0.5):
    """AWQ clip-search + grouped quant for E stacked same-shape linear layers.

    w: [E, co, ci] (nn.Linear layout), x: [E, n_tok, ci] input features.
    Returns (wq [E,co,ci], scales [E,co,ci//G], zeros [E,co,ci//G], clip [E,co,ci//G]).
    """
    E, co, ci = w.shape
    n_tok = x.shape[1]
    assert ci % group_size == 0
    n_group = ci // group_size
    tco = _choose_tco(co)
    tng = _choose_tng(n_group)
    n_shrink = max(int(max_shrink * n_grid), 1)

    # Grouped, lane-dense weight layout (plain XLA reshape/transpose outside the
    # kernel).  Standard AWQ uses group_size=128, which keeps the lane axis full;
    # smaller group sizes (like the toy demo) waste lanes but stay correct.
    # TODO(synk): on v5e, read w directly in [E, co, ci] with a (1, tco, tng*G)
    # block and reshape in-kernel to avoid the two full-weight HBM round trips.
    w_r = w.reshape(E, co, n_group, group_size).transpose(0, 2, 1, 3)    # [E,NG,co,G]

    if do_clip:
        # Per-group Gram matrix of the calibration activations, computed once in
        # XLA: Gram[e,g] = X_g^T X_g / N.  Makes the in-kernel clip-search cost
        # independent of the calibration token count.
        # TODO(synk): AWQ subsamples ~512 tokens before the clip search; with the
        # Gram formulation using all tokens is cheap, so no subsampling here.
        x_r = x.reshape(E, n_tok, n_group, group_size).transpose(0, 2, 1, 3)
        gram = jnp.einsum('egnk,egnl->egkl', x_r, x_r,
                          preferred_element_type=jnp.float32) / float(n_tok)
        gram = gram.astype(jnp.bfloat16)                                 # [E,NG,G,G]
        g_dim = group_size
    else:
        # Unused by the kernel; tiny dummy block so no activation DMA happens.
        gram = jnp.zeros((E, n_group, 1, 1), jnp.bfloat16)
        g_dim = 1

    kernel = functools.partial(
        _awq_quant_kernel, w_bit=w_bit, zero_point=zero_point, do_clip=do_clip,
        n_grid=n_grid, n_shrink=n_shrink)

    out_shapes = (
        jax.ShapeDtypeStruct((E, n_group, co, group_size), w.dtype),     # dequant W
        jax.ShapeDtypeStruct((E, n_group, co), jnp.float32),             # scales
        jax.ShapeDtypeStruct((E, n_group, co), jnp.float32),             # zeros
        jax.ShapeDtypeStruct((E, n_group, co), jnp.float32),             # clip max
    )

    # Grid: experts x group-tiles x channel-tiles, all independent ("parallel").
    # Channel axis innermost so the Gram block index is invariant along it.
    # TODO(synk): mark the gram in_spec pipeline_mode=pl.Buffered(1) (index is
    # invariant along the inner axis) to save one VMEM copy of the shared block.
    grid = (E, n_group // tng, co // tco)

    wq_r, scale_r, zero_r, clip_r = pl.pallas_call(
        kernel,
        out_shape=out_shapes,
        grid_spec=pltpu.PrefetchScalarGridSpec(
            num_scalar_prefetch=0,
            grid=grid,
            in_specs=[
                pl.BlockSpec((1, tng, g_dim, g_dim),
                             lambda e, g, i: (e, g, 0, 0)),              # Gram
                pl.BlockSpec((1, tng, tco, group_size),
                             lambda e, g, i: (e, g, i, 0)),              # w tile
            ],
            out_specs=[
                pl.BlockSpec((1, tng, tco, group_size), lambda e, g, i: (e, g, i, 0)),
                pl.BlockSpec((1, tng, tco), lambda e, g, i: (e, g, i)),
                pl.BlockSpec((1, tng, tco), lambda e, g, i: (e, g, i)),
                pl.BlockSpec((1, tng, tco), lambda e, g, i: (e, g, i)),
            ],
        ),
        compiler_params=pltpu.CompilerParams(
            dimension_semantics=("parallel", "parallel", "parallel"),
            # Group-tiled blocks keep the footprint ~10 MiB at real shapes
            # (tng=8, tco=256, G=128); 48 MiB is safe on v7x (64 MiB physical)
            # and leaves plenty of headroom on v5e/v6e (128 MiB).
            vmem_limit_bytes=48 * 1024 * 1024),
    )(gram, w_r)

    wq = wq_r.transpose(0, 2, 1, 3).reshape(E, co, ci)
    scales = scale_r.transpose(0, 2, 1)
    zeros = zero_r.transpose(0, 2, 1)
    clip_max = clip_r.transpose(0, 2, 1)
    return wq, scales, zeros, clip_max


def awq_expert_quantizer_forward(named_linears, input_feat, *,
                                 is_apply_clip=True, version="GEMM",
                                 module_name="expert", group_size=8,
                                 export_compatible=False, zero_point=True,
                                 w_bit=4):
    """JAX equivalent of AwqExpertQuantizerDP.forward (single-device path)."""
    # Module-level dummy parameter from __init__ (requires_grad=False) is dropped.
    del version  # TODO(synk): `version` selects the WQLinear packing class (GEMM/GEMV);
    #              int4->int32 qweight bit-packing has no clean Pallas equivalent here,
    #              so we return dequantized weights + per-group scales/zeros instead.

    avoid_clipping = ["q_", "k_", "query", "key", "Wqkv"]

    # Batch same-shaped linears with identical clip behaviour into one pallas_call
    # (replaces the per-layer dispatch loop of the DataParallel module).
    groups = {}
    for name, w in named_linears.items():
        do_clip = is_apply_clip and not any(a in name for a in avoid_clipping)
        key = (tuple(w.shape), tuple(input_feat[name].shape), bool(do_clip))
        groups.setdefault(key, []).append(name)

    clip_by_name = {}
    named_qlinears = {}
    for (_, _, do_clip), names in groups.items():
        w_stack = jnp.stack([named_linears[n] for n in names], axis=0)
        x_stack = jnp.stack([input_feat[n] for n in names], axis=0)
        wq, scales, zeros, clip_max = _quantize_linears(
            w_stack, x_stack, group_size=group_size, w_bit=w_bit,
            zero_point=zero_point, do_clip=do_clip)
        for e, n in enumerate(names):
            if do_clip:
                clip_by_name[n] = clip_max[e]
            if not export_compatible:
                named_qlinears[n] = {
                    "weight_dq": wq[e], "scales": scales[e], "zeros": zeros[e]}

    # append_str_prefix(clip_item, module_name + '.'), in the original dict order.
    clip_list = [(module_name + "." + n, clip_by_name[n])
                 for n in named_linears if n in clip_by_name]
    return named_qlinears, clip_list


if __name__ == "__main__":
    key = jax.random.PRNGKey(0)
    out_features, in_features, n_tokens = 32, 32, 8
    group_size, w_bit = 8, 4

    k1, k2, k3, k4, k5, k6 = jax.random.split(key, 6)
    # Three "expert" linears; 'q_proj' exercises the avoid_clipping branch.
    named_linears = {
        "w1": jax.random.normal(k1, (out_features, in_features), jnp.float32),
        "w2": jax.random.normal(k2, (out_features, in_features), jnp.float32),
        "q_proj": jax.random.normal(k3, (out_features, in_features), jnp.float32),
    }
    input_feat = {
        "w1": jax.random.normal(k4, (n_tokens, in_features), jnp.float32),
        "w2": jax.random.normal(k5, (n_tokens, in_features), jnp.float32),
        "q_proj": jax.random.normal(k6, (n_tokens, in_features), jnp.float32),
    }

    named_qlinears, clip_list = awq_expert_quantizer_forward(
        named_linears, input_feat,
        is_apply_clip=True, version="GEMM", module_name="mlp.experts.0",
        group_size=group_size, export_compatible=False, zero_point=True,
        w_bit=w_bit)

    for q in named_qlinears.values():
        jax.block_until_ready(q["weight_dq"])
        jax.block_until_ready(q["scales"])
        jax.block_until_ready(q["zeros"])
    for _, clip_max in clip_list:
        jax.block_until_ready(clip_max)

    print("KERNEL_OK")
</pallas_src>

<mosaic_0001>
module attributes {stable_mosaic.version = 11 : i64} {
  func.func @_awq_quant_kernel(%arg0: i32, %arg1: i32, %arg2: i32, %arg3: memref<1x4x8x8xbf16, #tpu.memory_space<vmem>>, %arg4: memref<1x4x32x8xf32, #tpu.memory_space<vmem>>, %arg5: memref<1x4x32x8xf32, #tpu.memory_space<vmem>>, %arg6: memref<1x4x32xf32, #tpu.memory_space<vmem>>, %arg7: memref<1x4x32xf32, #tpu.memory_space<vmem>>, %arg8: memref<1x4x32xf32, #tpu.memory_space<vmem>>) attributes {dimension_semantics = [#tpu.dimension_semantics<parallel>, #tpu.dimension_semantics<parallel>, #tpu.dimension_semantics<parallel>], iteration_bounds = array<i64: 2, 1, 1>, scalar_prefetch = 0 : i64, scratch_operands = 0 : i64, tpu.core_type = #tpu.core_type<tc>, window_params = [{transform_indices = @transform_0, window_bounds = array<i64: 1, 4, 8, 8>}, {transform_indices = @transform_1, window_bounds = array<i64: 1, 4, 32, 8>}, {transform_indices = @transform_2, window_bounds = array<i64: 1, 4, 32, 8>}, {transform_indices = @transform_3, window_bounds = array<i64: 1, 4, 32>}, {transform_indices = @transform_4, window_bounds = array<i64: 1, 4, 32>}, {transform_indices = @transform_5, window_bounds = array<i64: 1, 4, 32>}]} {
    %c0 = arith.constant 0 : index
    %c0_0 = arith.constant 0 : index
    %c0_1 = arith.constant 0 : index
    %c0_2 = arith.constant 0 : index
    %0 = vector.load %arg4[%c0, %c0_0, %c0_1, %c0_2] : memref<1x4x32x8xf32, #tpu.memory_space<vmem>>, vector<1x4x32x8xf32>
    %1 = vector.shape_cast %0 : vector<1x4x32x8xf32> to vector<4x32x8xf32>
    %cst = arith.constant dense<0xFF800000> : vector<4x32xf32>
    %2 = vector.multi_reduction <maximumf>, %1, %cst [2] : vector<4x32x8xf32> to vector<4x32xf32>
    %3 = vector.shape_cast %2 : vector<4x32xf32> to vector<4x32x1xf32>
    %cst_3 = arith.constant dense<0x7F800000> : vector<4x32xf32>
    %4 = vector.multi_reduction <minimumf>, %1, %cst_3 [2] : vector<4x32x8xf32> to vector<4x32xf32>
    %5 = vector.shape_cast %4 : vector<4x32xf32> to vector<4x32x1xf32>
    %cst_4 = arith.constant 0.000000e+00 : f32
    %6 = vector.broadcast %cst_4 : f32 to vector<4x32x1xf32>
    %7 = arith.subf %6, %5 : vector<4x32x1xf32>
    %8 = arith.maximumf %3, %7 : vector<4x32x1xf32>
    %c0_5 = arith.constant 0 : index
    %c0_6 = arith.constant 0 : index
    %c0_7 = arith.constant 0 : index
    %c0_8 = arith.constant 0 : index
    %9 = vector.load %arg3[%c0_5, %c0_6, %c0_7, %c0_8] : memref<1x4x8x8xbf16, #tpu.memory_space<vmem>>, vector<1x4x8x8xbf16>
    %10 = vector.shape_cast %9 : vector<1x4x8x8xbf16> to vector<4x8x8xbf16>
    %cst_9 = arith.constant 1.000000e+30 : f32
    %11 = vector.broadcast %cst_9 : f32 to vector<4x32xf32>
    %c0_i32 = arith.constant 0 : i32
    %c10_i32 = arith.constant 10 : i32
    %12 = arith.addi %c0_i32, %c10_i32 : i32
    %c1_i32 = arith.constant 1 : i32
    %13:2 = scf.for %arg9 = %c0_i32 to %12 step %c1_i32 iter_args(%arg10 = %11, %arg11 = %8) -> (vector<4x32xf32>, vector<4x32x1xf32>)  : i32 {
      %69 = arith.sitofp %arg9 : i32 to f32
      %cst_34 = arith.constant 2.000000e+01 : f32
      %70 = arith.divf %69, %cst_34 : f32
      %cst_35 = arith.constant 1.000000e+00 : f32
      %71 = arith.subf %cst_35, %70 : f32
      %72 = vector.broadcast %71 : f32 to vector<4x32x1xf32>
      %73 = arith.mulf %8, %72 : vector<4x32x1xf32>
      %cst_36 = arith.constant 0.000000e+00 : f32
      %74 = vector.broadcast %cst_36 : f32 to vector<4x32x1xf32>
      %75 = arith.subf %74, %73 : vector<4x32x1xf32>
      %76 = vector.broadcast %75 : vector<4x32x1xf32> to vector<4x32x8xf32>
      %77 = arith.maximumf %76, %1 : vector<4x32x8xf32>
      %78 = vector.broadcast %73 : vector<4x32x1xf32> to vector<4x32x8xf32>
      %79 = arith.minimumf %78, %77 : vector<4x32x8xf32>
      %cst_37 = arith.constant 0.000000e+00 : f32
      %80 = vector.broadcast %cst_37 : f32 to vector<4x32x1xf32>
      %81 = arith.subf %80, %73 : vector<4x32x1xf32>
      %82 = arith.maximumf %81, %3 : vector<4x32x1xf32>
      %83 = arith.minimumf %73, %82 : vector<4x32x1xf32>
      %cst_38 = arith.constant 0.000000e+00 : f32
      %84 = vector.broadcast %cst_38 : f32 to vector<4x32x1xf32>
      %85 = arith.subf %84, %73 : vector<4x32x1xf32>
      %86 = arith.maximumf %85, %5 : vector<4x32x1xf32>
      %87 = arith.minimumf %73, %86 : vector<4x32x1xf32>
      %88 = arith.subf %83, %87 : vector<4x32x1xf32>
      %cst_39 = arith.constant 9.99999974E-6 : f32
      %89 = vector.broadcast %cst_39 : f32 to vector<4x32x1xf32>
      %90 = arith.maximumf %88, %89 : vector<4x32x1xf32>
      %cst_40 = arith.constant 1.500000e+01 : f32
      %91 = vector.broadcast %cst_40 : f32 to vector<4x32x1xf32>
      %92 = arith.divf %90, %91 : vector<4x32x1xf32>
      %93 = tpu.reciprocal %92 {approx = true} : vector<4x32x1xf32> -> vector<4x32x1xf32>
      %cst_41 = arith.constant 0.000000e+00 : f32
      %94 = vector.broadcast %cst_41 : f32 to vector<4x32x1xf32>
      %95 = arith.subf %94, %87 : vector<4x32x1xf32>
      %96 = arith.mulf %95, %93 : vector<4x32x1xf32>
      %97 = math.roundeven %96 : vector<4x32x1xf32>
      %cst_42 = arith.constant 0.000000e+00 : f32
      %cst_43 = arith.constant 1.500000e+01 : f32
      %98 = vector.broadcast %cst_42 : f32 to vector<4x32x1xf32>
      %99 = arith.maximumf %98, %97 : vector<4x32x1xf32>
      %100 = vector.broadcast %cst_43 : f32 to vector<4x32x1xf32>
      %101 = arith.minimumf %100, %99 : vector<4x32x1xf32>
      %102 = vector.broadcast %93 : vector<4x32x1xf32> to vector<4x32x8xf32>
      %103 = arith.mulf %79, %102 : vector<4x32x8xf32>
      %104 = math.roundeven %103 : vector<4x32x8xf32>
      %105 = vector.broadcast %101 : vector<4x32x1xf32> to vector<4x32x8xf32>
      %106 = arith.addf %104, %105 : vector<4x32x8xf32>
      %cst_44 = arith.constant 0.000000e+00 : f32
      %cst_45 = arith.constant 1.500000e+01 : f32
      %107 = vector.broadcast %cst_44 : f32 to vector<4x32x8xf32>
      %108 = arith.maximumf %107, %106 : vector<4x32x8xf32>
      %109 = vector.broadcast %cst_45 : f32 to vector<4x32x8xf32>
      %110 = arith.minimumf %109, %108 : vector<4x32x8xf32>
      %111 = vector.broadcast %101 : vector<4x32x1xf32> to vector<4x32x8xf32>
      %112 = arith.subf %110, %111 : vector<4x32x8xf32>
      %113 = vector.broadcast %92 : vector<4x32x1xf32> to vector<4x32x8xf32>
      %114 = arith.mulf %112, %113 : vector<4x32x8xf32>
      %115 = arith.subf %114, %1 : vector<4x32x8xf32>
      %116 = arith.truncf %115 : vector<4x32x8xf32> to vector<4x32x8xbf16>
      %cst_46 = arith.constant dense<0.000000e+00> : vector<4x32x8xf32>
      %117 = tpu.matmul %116, %10, %cst_46 {dimension_numbers = #tpu.dot_dimension_numbers<[2], [1], [1], [2], [0, 0, 0, 1, 1, 2], [0], [0]>} : vector<4x32x8xbf16>, vector<4x8x8xbf16>, vector<4x32x8xf32> -> vector<4x32x8xf32>
      %118 = arith.mulf %117, %115 : vector<4x32x8xf32>
      %cst_47 = arith.constant dense<0.000000e+00> : vector<4x32xf32>
      %119 = vector.multi_reduction <add>, %118, %cst_47 [2] : vector<4x32x8xf32> to vector<4x32xf32>
      %120 = arith.cmpf olt, %119, %arg10 : vector<4x32xf32>
      %121 = arith.select %120, %119, %arg10 : vector<4x32xi1>, vector<4x32xf32>
      %122 = vector.shape_cast %120 : vector<4x32xi1> to vector<4x32x1xi1>
      %123 = arith.select %122, %73, %arg11 : vector<4x32x1xi1>, vector<4x32x1xf32>
      scf.yield %121, %123 : vector<4x32xf32>, vector<4x32x1xf32>
    }
    %c10_i32_10 = arith.constant 10 : i32
    %cst_11 = arith.constant 0.000000e+00 : f32
    %14 = vector.broadcast %cst_11 : f32 to vector<4x32x1xf32>
    %15 = arith.subf %14, %13#1 : vector<4x32x1xf32>
    %16 = vector.broadcast %15 : vector<4x32x1xf32> to vector<4x32x8xf32>
    %17 = arith.maximumf %16, %1 : vector<4x32x8xf32>
    %18 = vector.broadcast %13#1 : vector<4x32x1xf32> to vector<4x32x8xf32>
    %19 = arith.minimumf %18, %17 : vector<4x32x8xf32>
    %cst_12 = arith.constant 0.000000e+00 : f32
    %20 = vector.broadcast %cst_12 : f32 to vector<4x32x1xf32>
    %21 = arith.subf %20, %13#1 : vector<4x32x1xf32>
    %22 = arith.maximumf %21, %3 : vector<4x32x1xf32>
    %23 = arith.minimumf %13#1, %22 : vector<4x32x1xf32>
    %cst_13 = arith.constant 0.000000e+00 : f32
    %24 = vector.broadcast %cst_13 : f32 to vector<4x32x1xf32>
    %25 = arith.subf %24, %13#1 : vector<4x32x1xf32>
    %26 = arith.maximumf %25, %5 : vector<4x32x1xf32>
    %27 = arith.minimumf %13#1, %26 : vector<4x32x1xf32>
    %28 = arith.subf %23, %27 : vector<4x32x1xf32>
    %cst_14 = arith.constant 9.99999974E-6 : f32
    %29 = vector.broadcast %cst_14 : f32 to vector<4x32x1xf32>
    %30 = arith.maximumf %28, %29 : vector<4x32x1xf32>
    %cst_15 = arith.constant 1.500000e+01 : f32
    %31 = vector.broadcast %cst_15 : f32 to vector<4x32x1xf32>
    %32 = arith.divf %30, %31 : vector<4x32x1xf32>
    %cst_16 = arith.constant 0.000000e+00 : f32
    %33 = vector.broadcast %cst_16 : f32 to vector<4x32x1xf32>
    %34 = arith.subf %33, %27 : vector<4x32x1xf32>
    %35 = arith.divf %34, %32 : vector<4x32x1xf32>
    %36 = math.roundeven %35 : vector<4x32x1xf32>
    %cst_17 = arith.constant 0.000000e+00 : f32
    %cst_18 = arith.constant 1.500000e+01 : f32
    %37 = vector.broadcast %cst_17 : f32 to vector<4x32x1xf32>
    %38 = arith.maximumf %37, %36 : vector<4x32x1xf32>
    %39 = vector.broadcast %cst_18 : f32 to vector<4x32x1xf32>
    %40 = arith.minimumf %39, %38 : vector<4x32x1xf32>
    %41 = vector.broadcast %32 : vector<4x32x1xf32> to vector<4x32x8xf32>
    %42 = arith.divf %19, %41 : vector<4x32x8xf32>
    %43 = math.roundeven %42 : vector<4x32x8xf32>
    %44 = vector.broadcast %40 : vector<4x32x1xf32> to vector<4x32x8xf32>
    %45 = arith.addf %43, %44 : vector<4x32x8xf32>
    %cst_19 = arith.constant 0.000000e+00 : f32
    %cst_20 = arith.constant 1.500000e+01 : f32
    %46 = vector.broadcast %cst_19 : f32 to vector<4x32x8xf32>
    %47 = arith.maximumf %46, %45 : vector<4x32x8xf32>
    %48 = vector.broadcast %cst_20 : f32 to vector<4x32x8xf32>
    %49 = arith.minimumf %48, %47 : vector<4x32x8xf32>
    %50 = vector.broadcast %40 : vector<4x32x1xf32> to vector<4x32x8xf32>
    %51 = arith.subf %49, %50 : vector<4x32x8xf32>
    %52 = vector.broadcast %32 : vector<4x32x1xf32> to vector<4x32x8xf32>
    %53 = arith.mulf %51, %52 : vector<4x32x8xf32>
    %c0_21 = arith.constant 0 : index
    %c0_22 = arith.constant 0 : index
    %c0_23 = arith.constant 0 : index
    %c0_24 = arith.constant 0 : index
    %54 = vector.load %arg5[%c0_21, %c0_22, %c0_23, %c0_24] : memref<1x4x32x8xf32, #tpu.memory_space<vmem>>, vector<1x4x32x8xf32>
    %55 = vector.shape_cast %54 : vector<1x4x32x8xf32> to vector<4x32x8xf32>
    %56 = vector.shape_cast %53 : vector<4x32x8xf32> to vector<1x4x32x8xf32>
    tpu.vector_store %arg5[%c0_21, %c0_22, %c0_23, %c0_24], %56 {strides = array<i32>} : memref<1x4x32x8xf32, #tpu.memory_space<vmem>>, vector<1x4x32x8xf32>,
    %57 = vector.shape_cast %32 : vector<4x32x1xf32> to vector<4x32xf32>
    %c0_25 = arith.constant 0 : index
    %c0_26 = arith.constant 0 : index
    %c0_27 = arith.constant 0 : index
    %58 = vector.load %arg6[%c0_25, %c0_26, %c0_27] : memref<1x4x32xf32, #tpu.memory_space<vmem>>, vector<1x4x32xf32>
    %59 = vector.shape_cast %58 : vector<1x4x32xf32> to vector<4x32xf32>
    %60 = vector.shape_cast %57 : vector<4x32xf32> to vector<1x4x32xf32>
    tpu.vector_store %arg6[%c0_25, %c0_26, %c0_27], %60 {strides = array<i32>} : memref<1x4x32xf32, #tpu.memory_space<vmem>>, vector<1x4x32xf32>,
    %61 = vector.shape_cast %40 : vector<4x32x1xf32> to vector<4x32xf32>
    %c0_28 = arith.constant 0 : index
    %c0_29 = arith.constant 0 : index
    %c0_30 = arith.constant 0 : index
    %62 = vector.load %arg7[%c0_28, %c0_29, %c0_30] : memref<1x4x32xf32, #tpu.memory_space<vmem>>, vector<1x4x32xf32>
    %63 = vector.shape_cast %62 : vector<1x4x32xf32> to vector<4x32xf32>
    %64 = vector.shape_cast %61 : vector<4x32xf32> to vector<1x4x32xf32>
    tpu.vector_store %arg7[%c0_28, %c0_29, %c0_30], %64 {strides = array<i32>} : memref<1x4x32xf32, #tpu.memory_space<vmem>>, vector<1x4x32xf32>,
    %65 = vector.shape_cast %13#1 : vector<4x32x1xf32> to vector<4x32xf32>
    %c0_31 = arith.constant 0 : index
    %c0_32 = arith.constant 0 : index
    %c0_33 = arith.constant 0 : index
    %66 = vector.load %arg8[%c0_31, %c0_32, %c0_33] : memref<1x4x32xf32, #tpu.memory_space<vmem>>, vector<1x4x32xf32>
    %67 = vector.shape_cast %66 : vector<1x4x32xf32> to vector<4x32xf32>
    %68 = vector.shape_cast %65 : vector<4x32xf32> to vector<1x4x32xf32>
    tpu.vector_store %arg8[%c0_31, %c0_32, %c0_33], %68 {strides = array<i32>} : memref<1x4x32xf32, #tpu.memory_space<vmem>>, vector<1x4x32xf32>,
    return
  }
  func.func @transform_0(%arg0: i32, %arg1: i32, %arg2: i32) -> (i32, i32, i32, i32) {
    %c0_i32 = arith.constant 0 : i32
    %c0_i32_0 = arith.constant 0 : i32
    %c0_i32_1 = arith.constant 0 : i32
    return %arg0, %arg1, %c0_i32, %c0_i32_0 : i32, i32, i32, i32
  }
  func.func @transform_1(%arg0: i32, %arg1: i32, %arg2: i32) -> (i32, i32, i32, i32) {
    %c0_i32 = arith.constant 0 : i32
    %c0_i32_0 = arith.constant 0 : i32
    return %arg0, %arg1, %arg2, %c0_i32 : i32, i32, i32, i32
  }
  func.func @transform_2(%arg0: i32, %arg1: i32, %arg2: i32) -> (i32, i32, i32, i32) {
    %c0_i32 = arith.constant 0 : i32
    %c0_i32_0 = arith.constant 0 : i32
    return %arg0, %arg1, %arg2, %c0_i32 : i32, i32, i32, i32
  }
  func.func @transform_3(%arg0: i32, %arg1: i32, %arg2: i32) -> (i32, i32, i32) {
    %c0_i32 = arith.constant 0 : i32
    return %arg0, %arg1, %arg2 : i32, i32, i32
  }
  func.func @transform_4(%arg0: i32, %arg1: i32, %arg2: i32) -> (i32, i32, i32) {
    %c0_i32 = arith.constant 0 : i32
    return %arg0, %arg1, %arg2 : i32, i32, i32
  }
  func.func @transform_5(%arg0: i32, %arg1: i32, %arg2: i32) -> (i32, i32, i32) {
    %c0_i32 = arith.constant 0 : i32
    return %arg0, %arg1, %arg2 : i32, i32, i32
  }
}

</mosaic_0001>

<llo_original>
// kernel: tpu_custom_call.1
$region0: #{tpu_custom_call.1}
  #allocation0 [shape = 'u32[]', space=smem, size = 0x4, offset = 0x4, fixed_abs, tag = 'smem constant byte address 0x4 - core index']
  #allocation1 [shape = 'u32[72,128]{1,0:T(1,128)}', space=vmem, size = 0x9000, scoped, tag = 'internal scratch']
  %s0 = inlined_call_operand.vmem [shape: bf16[2,4,8,8], index: 0, kind: input, shape index: {}]
  %s1 = inlined_call_operand.vmem [shape: f32[2,4,32,8], index: 1, kind: input, shape index: {}]
  %s2 = inlined_call_operand.vmem [shape: f32[2,4,32,8], index: 2, kind: output, shape index: {0}]
  %s3 = inlined_call_operand.hbm [shape: f32[2,4,32], index: 3, kind: output, shape index: {1}]
  %s4 = inlined_call_operand.hbm [shape: f32[2,4,32], index: 4, kind: output, shape index: {2}]
  %s5 = inlined_call_operand.hbm [shape: f32[2,4,32], index: 5, kind: output, shape index: {3}]
  %6 = xla_tuple %s2, %s3, %s4, %s5
  %s7 = sld [smem:[#allocation0]]
  $region72: #{tpu_custom_call.1} parent=0
    _
  %s9 = ssub.s32 1, %s7
  %s10 = scalar_select 0, %s9, %s7
  $region1: #{tpu_custom_call.1} parent=0
    #allocation2 [shape = 'u8[4096]{0}', space=vmem, size = 0x1000, scoped, tag = 'output window, operand 1']
    #allocation3 [shape = 's32[2]{0}', space=sflag, size = 0x8, scoped, tag = 'scoped memory for tpu_custom_call.1']
    #allocation4 [shape = 'u8[4096]{0}', space=vmem, size = 0x1000, scoped, tag = 'output window, operand 2']
    #allocation5 [shape = 's32[2]{0}', space=sflag, size = 0x8, scoped, tag = 'scoped memory for tpu_custom_call.1']
    #allocation6 [shape = 'u8[4096]{0}', space=vmem, size = 0x1000, scoped, tag = 'output window, operand 3']
    %11 = vsyncpa [#allocation3], 0
    %s12 = scalar_lea.sflag [#allocation3], 1
    %13 = vsyncpa %s12, 0
    %14 = vsyncpa [#allocation5], 0
    %s15 = scalar_lea.sflag [#allocation5], 1
    %16 = vsyncpa %s15, 0
    loop: start=0, step=1, limit=4
    $region2: #{tpu_custom_call.1} parent=1 // loop_pre_header
      _
    $region3: #{tpu_custom_call.1} parent=1 // loop_header
      %s18 = sphi 0, %s22
      %p19 = scmp.ge.s32.totalorder %s18, 4
      %s25 = sphi 0, %s44
      %s26 = sphi 0, %s40
      %s27 = sphi 0, %s36
      %s28 = sphi 0, %s25
      %s29 = sphi 0, %s26
      %s30 = sphi 0, %s27
      %s31 = sphi 0, %s28
      %s32 = sphi 0, %s29
      %s33 = sphi 0, %s30
      %s49 = sphi 0, %s51
      %s52 = sphi 0, %s49
      %s53 = sphi 0, %s52
      %s69 = sphi 0, %s53
      %s79 = sphi 0, %s81
      %s82 = sphi 0, %s79
      %s83 = sphi 0, %s82
      %s99 = sphi 0, %s83
      %s109 = sphi 0, %s111
      %s112 = sphi 0, %s109
      %s113 = sphi 0, %s112
      %s129 = sphi 0, %s113
      %s139 = sphi 0, %s141
      %s142 = sphi 0, %s139
      %s143 = sphi 0, %s142
      %s159 = sphi 0, %s143
      %s169 = sphi 0, %s171
      %s172 = sphi 0, %s169
      %s173 = sphi 0, %s172
      %s189 = sphi 0, %s173
      %s199 = sphi 0, %s201
      %s202 = sphi 0, %s199
      %s203 = sphi 0, %s202
      %s219 = sphi 0, %s203
    $region4: #{tpu_custom_call.1} parent=1 // loop_header_branch
      %21 = sbr.rel (%p19) target = $region8
    $region5: #{tpu_custom_call.1} parent=1 // loop_body
      %s23 = ssub.s32 %s18, 1
      %s24 = ssub.s32 %s18, 2
      %s34 = sadd.s32 1, %s27
      %p35 = scmp.ge.s32.totalorder %s34, 1
      %s36 = scalar_select %p35, 0, %s34
      %s37 = sadd.s32 1, %s26
      %s38 = scalar_select %p35, %s37, %s26
      %p39 = scmp.ge.s32.totalorder %s38, 1
      %s40 = scalar_select %p39, 0, %s38
      %s41 = sadd.s32 1, %s25
      %s42 = scalar_select %p39, %s41, %s25
      %p43 = scmp.ge.s32.totalorder %s42, 2
      %s44 = scalar_select %p43, 0, %s42
      %s45 = ssub.s32 %s25, %s44
      %s46 = ssub.s32 %s26, %s40
      %s47 = sor.u32 %s45, %s46
      %p48 = scmp.eq.s32.totalorder %s47, 0
      %s50 = sadd.s32 %s49, 1
      %s51 = scalar_select %p48, %s49, %s50
      %p54 = pneg %p48
      %p55 = scmp.eq.s32.totalorder %s18, 1
      %p56 = por %p54, %p55
      %p57 = scmp.ne.s32.totalorder %s49, %s52
      %p58 = scmp.eq.s32.totalorder %s18, 0
      %p59 = por %p57, %p58
      %p60 = scmp.ne.s32.totalorder %s49, %s52
      %p61 = scmp.eq.s32.totalorder %s23, 1
      %p62 = por %p60, %p61
      %p63 = scmp.ne.s32.totalorder %s52, %s53
      %p64 = scmp.eq.s32.totalorder %s23, 0
      %p65 = por %p63, %p64
      %p66 = scmp.ne.s32.totalorder %s52, %s53
      %p67 = scmp.eq.s32.totalorder %s24, 1
      %p68 = por %p66, %p67
      %p70 = scmp.ne.s32.totalorder %s53, %s69
      %p71 = scmp.eq.s32.totalorder %s24, 0
      %p72 = por %p70, %p71
      %s73 = ssub.s32 %s25, %s44
      %s74 = ssub.s32 %s26, %s40
      %s75 = sor.u32 %s73, %s74
      %s76 = ssub.s32 %s27, %s36
      %s77 = sor.u32 %s75, %s76
      %p78 = scmp.eq.s32.totalorder %s77, 0
      %s80 = sadd.s32 %s79, 1
      %s81 = scalar_select %p78, %s79, %s80
      %p84 = pneg %p78
      %p85 = scmp.eq.s32.totalorder %s18, 1
      %p86 = por %p84, %p85
      %p87 = scmp.ne.s32.totalorder %s79, %s82
      %p88 = scmp.eq.s32.totalorder %s18, 0
      %p89 = por %p87, %p88
      %p90 = scmp.ne.s32.totalorder %s79, %s82
      %p91 = scmp.eq.s32.totalorder %s23, 1
      %p92 = por %p90, %p91
      %p93 = scmp.ne.s32.totalorder %s82, %s83
      %p94 = scmp.eq.s32.totalorder %s23, 0
      %p95 = por %p93, %p94
      %p96 = scmp.ne.s32.totalorder %s82, %s83
      %p97 = scmp.eq.s32.totalorder %s24, 1
      %p98 = por %p96, %p97
      %p100 = scmp.ne.s32.totalorder %s83, %s99
      %p101 = scmp.eq.s32.totalorder %s24, 0
      %p102 = por %p100, %p101
      %s103 = ssub.s32 %s25, %s44
      %s104 = ssub.s32 %s26, %s40
      %s105 = sor.u32 %s103, %s104
      %s106 = ssub.s32 %s27, %s36
      %s107 = sor.u32 %s105, %s106
      %p108 = scmp.eq.s32.totalorder %s107, 0
      %s110 = sadd.s32 %s109, 1
      %s111 = scalar_select %p108, %s109, %s110
      %p114 = pneg %p108
      %p115 = scmp.eq.s32.totalorder %s18, 1
      %p116 = por %p114, %p115
      %p117 = scmp.ne.s32.totalorder %s109, %s112
      %p118 = scmp.eq.s32.totalorder %s18, 0
      %p119 = por %p117, %p118
      %p120 = scmp.ne.s32.totalorder %s109, %s112
      %p121 = scmp.eq.s32.totalorder %s23, 1
      %p122 = por %p120, %p121
      %p123 = scmp.ne.s32.totalorder %s112, %s113
      %p124 = scmp.eq.s32.totalorder %s23, 0
      %p125 = por %p123, %p124
      %p126 = scmp.ne.s32.totalorder %s112, %s113
      %p127 = scmp.eq.s32.totalorder %s24, 1
      %p128 = por %p126, %p127
      %p130 = scmp.ne.s32.totalorder %s113, %s129
      %p131 = scmp.eq.s32.totalorder %s24, 0
      %p132 = por %p130, %p131
      %s133 = ssub.s32 %s25, %s44
      %s134 = ssub.s32 %s26, %s40
      %s135 = sor.u32 %s133, %s134
      %s136 = ssub.s32 %s27, %s36
      %s137 = sor.u32 %s135, %s136
      %p138 = scmp.eq.s32.totalorder %s137, 0
      %s140 = sadd.s32 %s139, 1
      %s141 = scalar_select %p138, %s139, %s140
      %p144 = pneg %p138
      %p145 = scmp.eq.s32.totalorder %s18, 1
      %p146 = por %p144, %p145
      %p147 = scmp.ne.s32.totalorder %s139, %s142
      %p148 = scmp.eq.s32.totalorder %s18, 0
      %p149 = por %p147, %p148
      %p150 = scmp.ne.s32.totalorder %s139, %s142
      %p151 = scmp.eq.s32.totalorder %s23, 1
      %p152 = por %p150, %p151
      %p153 = scmp.ne.s32.totalorder %s142, %s143
      %p154 = scmp.eq.s32.totalorder %s23, 0
      %p155 = por %p153, %p154
      %p156 = scmp.ne.s32.totalorder %s142, %s143
      %p157 = scmp.eq.s32.totalorder %s24, 1
      %p158 = por %p156, %p157
      %p160 = scmp.ne.s32.totalorder %s143, %s159
      %p161 = scmp.eq.s32.totalorder %s24, 0
      %p162 = por %p160, %p161
      %s163 = ssub.s32 %s25, %s44
      %s164 = ssub.s32 %s26, %s40
      %s165 = sor.u32 %s163, %s164
      %s166 = ssub.s32 %s27, %s36
      %s167 = sor.u32 %s165, %s166
      %p168 = scmp.eq.s32.totalorder %s167, 0
      %s170 = sadd.s32 %s169, 1
      %s171 = scalar_select %p168, %s169, %s170
      %p174 = pneg %p168
      %p175 = scmp.eq.s32.totalorder %s18, 1
      %p176 = por %p174, %p175
      %p177 = scmp.ne.s32.totalorder %s169, %s172
      %p178 = scmp.eq.s32.totalorder %s18, 0
      %p179 = por %p177, %p178
      %p180 = scmp.ne.s32.totalorder %s169, %s172
      %p181 = scmp.eq.s32.totalorder %s23, 1
      %p182 = por %p180, %p181
      %p183 = scmp.ne.s32.totalorder %s172, %s173
      %p184 = scmp.eq.s32.totalorder %s23, 0
      %p185 = por %p183, %p184
      %p186 = scmp.ne.s32.totalorder %s172, %s173
      %p187 = scmp.eq.s32.totalorder %s24, 1
      %p188 = por %p186, %p187
      %p190 = scmp.ne.s32.totalorder %s173, %s189
      %p191 = scmp.eq.s32.totalorder %s24, 0
      %p192 = por %p190, %p191
      %s193 = ssub.s32 %s25, %s44
      %s194 = ssub.s32 %s26, %s40
      %s195 = sor.u32 %s193, %s194
      %s196 = ssub.s32 %s27, %s36
      %s197 = sor.u32 %s195, %s196
      %p198 = scmp.eq.s32.totalorder %s197, 0
      %s200 = sadd.s32 %s199, 1
      %s201 = scalar_select %p198, %s199, %s200
      %p204 = pneg %p198
      %p205 = scmp.eq.s32.totalorder %s18, 1
      %p206 = por %p204, %p205
      %p207 = scmp.ne.s32.totalorder %s199, %s202
      %p208 = scmp.eq.s32.totalorder %s18, 0
      %p209 = por %p207, %p208
      %p210 = scmp.ne.s32.totalorder %s199, %s202
      %p211 = scmp.eq.s32.totalorder %s23, 1
      %p212 = por %p210, %p211
      %p213 = scmp.ne.s32.totalorder %s202, %s203
      %p214 = scmp.eq.s32.totalorder %s23, 0
      %p215 = por %p213, %p214
      %p216 = scmp.ne.s32.totalorder %s202, %s203
      %p217 = scmp.eq.s32.totalorder %s24, 1
      %p218 = por %p216, %p217
      %p220 = scmp.ne.s32.totalorder %s203, %s219
      %p221 = scmp.eq.s32.totalorder %s24, 0
      %p222 = por %p220, %p221
      %p223 = scmp.le.s32.totalorder 1, %s18
      %p224 = scmp.lt.s32.totalorder %s18, 3
      %p225 = pnand %p223, %p224
      %p226 = pneg %p225
      // Predicated region
      $region9: #{tpu_custom_call.1} parent=5 // pred_check
        _
      $region10: #{tpu_custom_call.1} parent=5 // pred_check_branch
        %228 = sbr.rel (%p225) target = $region12
      $region11: #{tpu_custom_call.1} parent=5 // pred_region
        %s229 = ssub.s32 %s18, 1
      $region12: #{tpu_custom_call.1} parent=5 // pred_fallthru
        _
      %p230 = scmp.lt.s32.totalorder %s18, 2
      // Predicated region
      $region13: #{tpu_custom_call.1} parent=5 // pred_check
        %p231 = pneg %p230
      $region14: #{tpu_custom_call.1} parent=5 // pred_check_branch
        %233 = sbr.rel (%p231) target = $region16
      $region15: #{tpu_custom_call.1} parent=5 // pred_region
        // Predicated region
        $region17: #{tpu_custom_call.1} parent=15 // pred_check
          %p234 = pneg %p59
        $region18: #{tpu_custom_call.1} parent=15 // pred_check_branch
          %236 = sbr.rel (%p234) target = $region20
        $region19: #{tpu_custom_call.1} parent=15 // pred_region
          %s237 = smul.u32 4, %s26
          %p238 = scmp.lt.s32.totalorder %s25, 1
          %s239 = scalar_select %p238, %s25, 1
          %p240 = scmp.lt.s32.totalorder %s237, 3
          %s241 = scalar_select %p240, %s237, 3
          %s242 = smul.addr %s239, 4
          %s243 = sadd.s32 %s241, %s242
          %s244 = smul.addr %s243, 4
          %s245 = scalar_lea.vmem %s0, %s244
          %s246 = smul.u32 4, %s26
        $region20: #{tpu_custom_call.1} parent=15 // pred_fallthru
          _
        // Predicated region
        $region21: #{tpu_custom_call.1} parent=15 // pred_check
          %p247 = pneg %p89
        $region22: #{tpu_custom_call.1} parent=15 // pred_check_branch
          %249 = sbr.rel (%p247) target = $region24
        $region23: #{tpu_custom_call.1} parent=15 // pred_region
          %s250 = smul.u32 4, %s26
          %s251 = smul.u32 4, %s27
          %p252 = scmp.lt.s32.totalorder %s25, 1
          %s253 = scalar_select %p252, %s25, 1
          %p254 = scmp.lt.s32.totalorder %s250, 3
          %s255 = scalar_select %p254, %s250, 3
          %p256 = scmp.lt.s32.totalorder %s251, 3
          %s257 = scalar_select %p256, %s251, 3
          %s258 = smul.addr %s255, 4
          %s259 = sadd.s32 %s257, %s258
          %s260 = smul.addr %s253, 16
          %s261 = sadd.s32 %s259, %s260
          %s262 = smul.addr %s261, 8
          %s263 = scalar_lea.vmem %s1, %s262
          %s264 = smul.u32 4, %s26
          %s265 = smul.u32 4, %s27
        $region24: #{tpu_custom_call.1} parent=15 // pred_fallthru
          _
      $region16: #{tpu_custom_call.1} parent=5 // pred_fallthru
        _
      %p266 = scmp.le.s32.totalorder 1, %s18
      %p267 = scmp.lt.s32.totalorder %s18, 3
      %p268 = pnand %p266, %p267
      %p269 = pneg %p268
      // Predicated region
      $region25: #{tpu_custom_call.1} parent=5 // pred_check
        _
      $region26: #{tpu_custom_call.1} parent=5 // pred_check_branch
        %271 = sbr.rel (%p268) target = $region28
      $region27: #{tpu_custom_call.1} parent=5 // pred_region
        %s272 = ssub.s32 %s18, 1
        %s273 = smul.u32 4, %s29
        %p274 = scmp.lt.s32.totalorder %s28, 1
        %s275 = scalar_select %p274, %s28, 1
        %p276 = scmp.lt.s32.totalorder %s273, 3
        %s277 = scalar_select %p276, %s273, 3
        %s278 = smul.addr %s275, 4
        %s279 = sadd.s32 %s277, %s278
        %s280 = smul.addr %s279, 4
        %s281 = scalar_lea.vmem %s0, %s280
        %p282 = pneg %p65
        %p283 = pneg %p62
        %s284 = smul.u32 4, %s29
        %s285 = smul.u32 4, %s30
        %p286 = scmp.lt.s32.totalorder %s28, 1
        %s287 = scalar_select %p286, %s28, 1
        %p288 = scmp.lt.s32.totalorder %s284, 3
        %s289 = scalar_select %p288, %s284, 3
        %p290 = scmp.lt.s32.totalorder %s285, 3
        %s291 = scalar_select %p290, %s285, 3
        %s292 = smul.addr %s289, 4
        %s293 = sadd.s32 %s291, %s292
        %s294 = smul.addr %s287, 16
        %s295 = sadd.s32 %s293, %s294
        %s296 = smul.addr %s295, 8
        %s297 = scalar_lea.vmem %s1, %s296
        %p298 = pneg %p95
        %p299 = pneg %p92
        %p300 = pneg %p125
        %p301 = pneg %p122
        %s302 = smul.u32 4, %s29
        %s303 = smul.u32 4, %s30
        %p304 = scmp.lt.s32.totalorder %s28, 1
        %s305 = scalar_select %p304, %s28, 1
        %p306 = scmp.lt.s32.totalorder %s302, 3
        %s307 = scalar_select %p306, %s302, 3
        %p308 = scmp.lt.s32.totalorder %s303, 3
        %s309 = scalar_select %p308, %s303, 3
        %s310 = smul.addr %s307, 4
        %s311 = sadd.s32 %s309, %s310
        %s312 = smul.addr %s305, 16
        %s313 = sadd.s32 %s311, %s312
        %s314 = smul.addr %s313, 8
        %s315 = scalar_lea.vmem %s2, %s314
        %p316 = pneg %p155
        %p317 = pneg %p152
        %s318 = sand.u32 %s142, 1
        %s319 = scalar_lea.sflag [#allocation3], %s318
        %s320 = sand.u32 %s142, 1
        %s321 = smul.addr %s320, 4
        %s322 = scalar_lea.vmem [#allocation2], %s321
        %p323 = pneg %p185
        %p324 = pneg %p182
        %s325 = sand.u32 %s23, 1
        %s326 = scalar_lea.sflag [#allocation5], %s325
        %s327 = sand.u32 %s172, 1
        %s328 = smul.addr %s327, 4
        %s329 = scalar_lea.vmem [#allocation4], %s328
        %p330 = pneg %p215
        %p331 = pneg %p212
        %s332 = sand.u32 %s23, 1
        %s333 = scalar_lea.sflag [#allocation5], %s332
        %s334 = sand.u32 %s202, 1
        %s335 = smul.addr %s334, 4
        %s336 = scalar_lea.vmem [#allocation6], %s335
        %s337 = smul.u32 4, %s29
        %p338 = scmp.lt.s32.totalorder %s28, 1
        %s339 = scalar_select %p338, %s28, 1
        %p340 = scmp.lt.s32.totalorder %s337, 3
        %s341 = scalar_select %p340, %s337, 3
        %s342 = smul.addr %s339, 4
        %s343 = sadd.s32 %s341, %s342
        %s344 = smul.addr %s343, 4
        %s345 = scalar_lea.vmem %s0, %s344
        %s346 = smul.u32 4, %s29
        %s347 = smul.u32 4, %s29
        %s348 = smul.u32 4, %s30
        %p349 = scmp.lt.s32.totalorder %s28, 1
        %s350 = scalar_select %p349, %s28, 1
        %p351 = scmp.lt.s32.totalorder %s347, 3
        %s352 = scalar_select %p351, %s347, 3
        %p353 = scmp.lt.s32.totalorder %s348, 3
        %s354 = scalar_select %p353, %s348, 3
        %s355 = smul.addr %s352, 4
        %s356 = sadd.s32 %s354, %s355
        %s357 = smul.addr %s350, 16
        %s358 = sadd.s32 %s356, %s357
        %s359 = smul.addr %s358, 8
        %s360 = scalar_lea.vmem %s1, %s359
        %s361 = smul.u32 4, %s29
        %s362 = smul.u32 4, %s30
        %s363 = smul.u32 4, %s29
        %s364 = smul.u32 4, %s30
        %p365 = scmp.lt.s32.totalorder %s28, 1
        %s366 = scalar_select %p365, %s28, 1
        %p367 = scmp.lt.s32.totalorder %s363, 3
        %s368 = scalar_select %p367, %s363, 3
        %p369 = scmp.lt.s32.totalorder %s364, 3
        %s370 = scalar_select %p369, %s364, 3
        %s371 = smul.addr %s368, 4
        %s372 = sadd.s32 %s370, %s371
        %s373 = smul.addr %s366, 16
        %s374 = sadd.s32 %s372, %s373
        %s375 = smul.addr %s374, 8
        %s376 = scalar_lea.vmem %s2, %s375
        %s377 = smul.u32 4, %s29
        %s378 = smul.u32 4, %s30
        %v380 = vld [vmem:[%s360] sm:$0xff]
        %v381 = vld [vmem:[%s360 + $0x8] sm:$0xff]
        %v382 = vld [vmem:[%s360 + $0x10] sm:$0xff]
        %v383 = vld [vmem:[%s360 + $0x18] sm:$0xff]
        %v384 = vld [vmem:[%s360 + $0x20] sm:$0xff]
        %v385 = vld [vmem:[%s360 + $0x28] sm:$0xff]
        %v386 = vld [vmem:[%s360 + $0x30] sm:$0xff]
        %v387 = vld [vmem:[%s360 + $0x38] sm:$0xff]
        %v388 = vld [vmem:[%s360 + $0x40] sm:$0xff]
        %v389 = vld [vmem:[%s360 + $0x48] sm:$0xff]
        %v390 = vld [vmem:[%s360 + $0x50] sm:$0xff]
        %v391 = vld [vmem:[%s360 + $0x58] sm:$0xff]
        %v392 = vld [vmem:[%s360 + $0x60] sm:$0xff]
        %v393 = vld [vmem:[%s360 + $0x68] sm:$0xff]
        %v394 = vld [vmem:[%s360 + $0x70] sm:$0xff]
        %v395 = vld [vmem:[%s360 + $0x78] sm:$0xff]
        %vm396 = vcmask 64512
        %v397 = vsel %vm396, %v380, -inf
        %398 = vmax.xlane.f32.xlu0 %v397
        %v399 = vpop.xlane.xlu0 %398
        %v400 = vsel %vm396, %v381, -inf
        %401 = vmax.xlane.f32.xlu0 %v400
        %v402 = vpop.xlane.xlu0 %401
        %v403 = vsel %vm396, %v382, -inf
        %404 = vmax.xlane.f32.xlu0 %v403
        %v405 = vpop.xlane.xlu0 %404
        %v406 = vsel %vm396, %v383, -inf
        %407 = vmax.xlane.f32.xlu0 %v406
        %v408 = vpop.xlane.xlu0 %407
        %v409 = vsel %vm396, %v384, -inf
        %410 = vmax.xlane.f32.xlu0 %v409
        %v411 = vpop.xlane.xlu0 %410
        %v412 = vsel %vm396, %v385, -inf
        %413 = vmax.xlane.f32.xlu0 %v412
        %v414 = vpop.xlane.xlu0 %413
        %v415 = vsel %vm396, %v386, -inf
        %416 = vmax.xlane.f32.xlu0 %v415
        %v417 = vpop.xlane.xlu0 %416
        %v418 = vsel %vm396, %v387, -inf
        %419 = vmax.xlane.f32.xlu0 %v418
        %v420 = vpop.xlane.xlu0 %419
        %v421 = vsel %vm396, %v388, -inf
        %422 = vmax.xlane.f32.xlu0 %v421
        %v423 = vpop.xlane.xlu0 %422
        %v424 = vsel %vm396, %v389, -inf
        %425 = vmax.xlane.f32.xlu0 %v424
        %v426 = vpop.xlane.xlu0 %425
        %v427 = vsel %vm396, %v390, -inf
        %428 = vmax.xlane.f32.xlu0 %v427
        %v429 = vpop.xlane.xlu0 %428
        %v430 = vsel %vm396, %v391, -inf
        %431 = vmax.xlane.f32.xlu0 %v430
        %v432 = vpop.xlane.xlu0 %431
        %v433 = vsel %vm396, %v392, -inf
        %434 = vmax.xlane.f32.xlu0 %v433
        %v435 = vpop.xlane.xlu0 %434
        %v436 = vsel %vm396, %v393, -inf
        %437 = vmax.xlane.f32.xlu0 %v436
        %v438 = vpop.xlane.xlu0 %437
        %v439 = vsel %vm396, %v394, -inf
        %440 = vmax.xlane.f32.xlu0 %v439
        %v441 = vpop.xlane.xlu0 %440
        %v442 = vsel %vm396, %v395, -inf
        %443 = vmax.xlane.f32.xlu0 %v442
        %v444 = vpop.xlane.xlu0 %443
        %v445 = vsel %vm396, %v380, inf
        %446 = vmin.xlane.f32.xlu0 %v445
        %v447 = vpop.xlane.xlu0 %446
        %v448 = vsel %vm396, %v381, inf
        %449 = vmin.xlane.f32.xlu0 %v448
        %v450 = vpop.xlane.xlu0 %449
        %v451 = vsel %vm396, %v382, inf
        %452 = vmin.xlane.f32.xlu0 %v451
        %v453 = vpop.xlane.xlu0 %452
        %v454 = vsel %vm396, %v383, inf
        %455 = vmin.xlane.f32.xlu0 %v454
        %v456 = vpop.xlane.xlu0 %455
        %v457 = vsel %vm396, %v384, inf
        %458 = vmin.xlane.f32.xlu0 %v457
        %v459 = vpop.xlane.xlu0 %458
        %v460 = vsel %vm396, %v385, inf
        %461 = vmin.xlane.f32.xlu0 %v460
        %v462 = vpop.xlane.xlu0 %461
        %v463 = vsel %vm396, %v386, inf
        %464 = vmin.xlane.f32.xlu0 %v463
        %v465 = vpop.xlane.xlu0 %464
        %v466 = vsel %vm396, %v387, inf
        %467 = vmin.xlane.f32.xlu0 %v466
        %v468 = vpop.xlane.xlu0 %467
        %v469 = vsel %vm396, %v388, inf
        %470 = vmin.xlane.f32.xlu0 %v469
        %v471 = vpop.xlane.xlu0 %470
        %v472 = vsel %vm396, %v389, inf
        %473 = vmin.xlane.f32.xlu0 %v472
        %v474 = vpop.xlane.xlu0 %473
        %v475 = vsel %vm396, %v390, inf
        %476 = vmin.xlane.f32.xlu0 %v475
        %v477 = vpop.xlane.xlu0 %476
        %v478 = vsel %vm396, %v391, inf
        %479 = vmin.xlane.f32.xlu0 %v478
        %v480 = vpop.xlane.xlu0 %479
        %v481 = vsel %vm396, %v392, inf
        %482 = vmin.xlane.f32.xlu0 %v481
        %v483 = vpop.xlane.xlu0 %482
        %v484 = vsel %vm396, %v393, inf
        %485 = vmin.xlane.f32.xlu0 %v484
        %v486 = vpop.xlane.xlu0 %485
        %v487 = vsel %vm396, %v394, inf
        %488 = vmin.xlane.f32.xlu0 %v487
        %v489 = vpop.xlane.xlu0 %488
        %v490 = vsel %vm396, %v395, inf
        %491 = vmin.xlane.f32.xlu0 %v490
        %v492 = vpop.xlane.xlu0 %491
        %v493 = vsub.f32 0.0, %v447
        %v494 = vsub.f32 0.0, %v450
        %v495 = vsub.f32 0.0, %v453
        %v496 = vsub.f32 0.0, %v456
        %v497 = vsub.f32 0.0, %v459
        %v498 = vsub.f32 0.0, %v462
        %v499 = vsub.f32 0.0, %v465
        %v500 = vsub.f32 0.0, %v468
        %v501 = vsub.f32 0.0, %v471
        %v502 = vsub.f32 0.0, %v474
        %v503 = vsub.f32 0.0, %v477
        %v504 = vsub.f32 0.0, %v480
        %v505 = vsub.f32 0.0, %v483
        %v506 = vsub.f32 0.0, %v486
        %v507 = vsub.f32 0.0, %v489
        %v508 = vsub.f32 0.0, %v492
        %v509 = vmax.f32 %v399, %v493
        %v510 = vmax.f32 %v402, %v494
        %v511 = vmax.f32 %v405, %v495
        %v512 = vmax.f32 %v408, %v496
        %v513 = vmax.f32 %v411, %v497
        %v514 = vmax.f32 %v414, %v498
        %v515 = vmax.f32 %v417, %v499
        %v516 = vmax.f32 %v420, %v500
        %v517 = vmax.f32 %v423, %v501
        %v518 = vmax.f32 %v426, %v502
        %v519 = vmax.f32 %v429, %v503
        %v520 = vmax.f32 %v432, %v504
        %v521 = vmax.f32 %v435, %v505
        %v522 = vmax.f32 %v438, %v506
        %v523 = vmax.f32 %v441, %v507
        %v524 = vmax.f32 %v444, %v508
        %v525 = vld [vmem:[%s345] sm:$0xf]
        %v526 = vld [vmem:[%s345 + $0x4] sm:$0xf]
        %v527 = vld [vmem:[%s345 + $0x8] sm:$0xf]
        %v528 = vld [vmem:[%s345 + $0xc] sm:$0xf]
        loop: start=0, step=1, limit=10
        $region29: #{tpu_custom_call.1} parent=27 // loop_pre_header
          _
        $region30: #{tpu_custom_call.1} parent=27 // loop_header
          %s530 = sphi 0, %s534
          %p531 = scmp.ge.s32.totalorder %s530, 10
          %v535 = vphi 1e+30, %v1235
          %v536 = vphi 1e+30, %v1236
          %v537 = vphi 1e+30, %v1237
          %v538 = vphi 1e+30, %v1238
          %v539 = vphi 1e+30, %v1239
          %v540 = vphi 1e+30, %v1240
          %v541 = vphi 1e+30, %v1241
          %v542 = vphi 1e+30, %v1242
          %v543 = vphi 1e+30, %v1243
          %v544 = vphi 1e+30, %v1244
          %v545 = vphi 1e+30, %v1245
          %v546 = vphi 1e+30, %v1246
          %v547 = vphi 1e+30, %v1247
          %v548 = vphi 1e+30, %v1248
          %v549 = vphi 1e+30, %v1249
          %v550 = vphi 1e+30, %v1250
          %v551 = vphi %v509, %v1251
          %v552 = vphi %v510, %v1252
          %v553 = vphi %v511, %v1253
          %v554 = vphi %v512, %v1254
          %v555 = vphi %v513, %v1255
          %v556 = vphi %v514, %v1256
          %v557 = vphi %v515, %v1257
          %v558 = vphi %v516, %v1258
          %v559 = vphi %v517, %v1259
          %v560 = vphi %v518, %v1260
          %v561 = vphi %v519, %v1261
          %v562 = vphi %v520, %v1262
          %v563 = vphi %v521, %v1263
          %v564 = vphi %v522, %v1264
          %v565 = vphi %v523, %v1265
          %v566 = vphi %v524, %v1266
        $region31: #{tpu_custom_call.1} parent=27 // loop_header_branch
          %533 = sbr.rel (%p531) target = $region35
        $region32: #{tpu_custom_call.1} parent=27 // loop_body
          %s567 = scvt.s32.f32 %s530
          %v568 = vrcp.pop 20.0
          %v569 = vmul.f32 20.0, %v568
          %v570 = vsub.f32 1.0, %v569
          %v571 = vmul.f32 %v568, %v570
          %v572 = vadd.f32 %v568, %v571
          %vm573 = vweird.f32 %v568
          %v574 = vsel %vm573, %v568, %v572
          %s575 = vtos %v574
          %s576 = smul.f32 %s567, %s575
          %s577 = ssub.f32 1.0, %s576
          %v578 = vstv %s577
          %v579 = vmul.f32 %v509, %v578
          %v580 = vmul.f32 %v510, %v578
          %v581 = vmul.f32 %v511, %v578
          %v582 = vmul.f32 %v512, %v578
          %v583 = vmul.f32 %v513, %v578
          %v584 = vmul.f32 %v514, %v578
          %v585 = vmul.f32 %v515, %v578
          %v586 = vmul.f32 %v516, %v578
          %v587 = vmul.f32 %v517, %v578
          %v588 = vmul.f32 %v518, %v578
          %v589 = vmul.f32 %v519, %v578
          %v590 = vmul.f32 %v520, %v578
          %v591 = vmul.f32 %v521, %v578
          %v592 = vmul.f32 %v522, %v578
          %v593 = vmul.f32 %v523, %v578
          %v594 = vmul.f32 %v524, %v578
          %v595 = vsub.f32 0.0, %v579
          %v596 = vsub.f32 0.0, %v580
          %v597 = vsub.f32 0.0, %v581
          %v598 = vsub.f32 0.0, %v582
          %v599 = vsub.f32 0.0, %v583
          %v600 = vsub.f32 0.0, %v584
          %v601 = vsub.f32 0.0, %v585
          %v602 = vsub.f32 0.0, %v586
          %v603 = vsub.f32 0.0, %v587
          %v604 = vsub.f32 0.0, %v588
          %v605 = vsub.f32 0.0, %v589
          %v606 = vsub.f32 0.0, %v590
          %v607 = vsub.f32 0.0, %v591
          %v608 = vsub.f32 0.0, %v592
          %v609 = vsub.f32 0.0, %v593
          %v610 = vsub.f32 0.0, %v594
          %v611 = vmax.f32 %v595, %v380
          %v612 = vmax.f32 %v596, %v381
          %v613 = vmax.f32 %v597, %v382
          %v614 = vmax.f32 %v598, %v383
          %v615 = vmax.f32 %v599, %v384
          %v616 = vmax.f32 %v600, %v385
          %v617 = vmax.f32 %v601, %v386
          %v618 = vmax.f32 %v602, %v387
          %v619 = vmax.f32 %v603, %v388
          %v620 = vmax.f32 %v604, %v389
          %v621 = vmax.f32 %v605, %v390
          %v622 = vmax.f32 %v606, %v391
          %v623 = vmax.f32 %v607, %v392
          %v624 = vmax.f32 %v608, %v393
          %v625 = vmax.f32 %v609, %v394
          %v626 = vmax.f32 %v610, %v395
          %v627 = vmin.f32 %v579, %v611
          %v628 = vmin.f32 %v580, %v612
          %v629 = vmin.f32 %v581, %v613
          %v630 = vmin.f32 %v582, %v614
          %v631 = vmin.f32 %v583, %v615
          %v632 = vmin.f32 %v584, %v616
          %v633 = vmin.f32 %v585, %v617
          %v634 = vmin.f32 %v586, %v618
          %v635 = vmin.f32 %v587, %v619
          %v636 = vmin.f32 %v588, %v620
          %v637 = vmin.f32 %v589, %v621
          %v638 = vmin.f32 %v590, %v622
          %v639 = vmin.f32 %v591, %v623
          %v640 = vmin.f32 %v592, %v624
          %v641 = vmin.f32 %v593, %v625
          %v642 = vmin.f32 %v594, %v626
          %v643 = vmax.f32 %v595, %v399
          %v644 = vmax.f32 %v596, %v402
          %v645 = vmax.f32 %v597, %v405
          %v646 = vmax.f32 %v598, %v408
          %v647 = vmax.f32 %v599, %v411
          %v648 = vmax.f32 %v600, %v414
          %v649 = vmax.f32 %v601, %v417
          %v650 = vmax.f32 %v602, %v420
          %v651 = vmax.f32 %v603, %v423
          %v652 = vmax.f32 %v604, %v426
          %v653 = vmax.f32 %v605, %v429
          %v654 = vmax.f32 %v606, %v432
          %v655 = vmax.f32 %v607, %v435
          %v656 = vmax.f32 %v608, %v438
          %v657 = vmax.f32 %v609, %v441
          %v658 = vmax.f32 %v610, %v444
          %v659 = vmin.f32 %v579, %v643
          %v660 = vmin.f32 %v580, %v644
          %v661 = vmin.f32 %v581, %v645
          %v662 = vmin.f32 %v582, %v646
          %v663 = vmin.f32 %v583, %v647
          %v664 = vmin.f32 %v584, %v648
          %v665 = vmin.f32 %v585, %v649
          %v666 = vmin.f32 %v586, %v650
          %v667 = vmin.f32 %v587, %v651
          %v668 = vmin.f32 %v588, %v652
          %v669 = vmin.f32 %v589, %v653
          %v670 = vmin.f32 %v590, %v654
          %v671 = vmin.f32 %v591, %v655
          %v672 = vmin.f32 %v592, %v656
          %v673 = vmin.f32 %v593, %v657
          %v674 = vmin.f32 %v594, %v658
          %v675 = vmax.f32 %v595, %v447
          %v676 = vmax.f32 %v596, %v450
          %v677 = vmax.f32 %v597, %v453
          %v678 = vmax.f32 %v598, %v456
          %v679 = vmax.f32 %v599, %v459
          %v680 = vmax.f32 %v600, %v462
          %v681 = vmax.f32 %v601, %v465
          %v682 = vmax.f32 %v602, %v468
          %v683 = vmax.f32 %v603, %v471
          %v684 = vmax.f32 %v604, %v474
          %v685 = vmax.f32 %v605, %v477
          %v686 = vmax.f32 %v606, %v480
          %v687 = vmax.f32 %v607, %v483
          %v688 = vmax.f32 %v608, %v486
          %v689 = vmax.f32 %v609, %v489
          %v690 = vmax.f32 %v610, %v492
          %v691 = vmin.f32 %v579, %v675
          %v692 = vmin.f32 %v580, %v676
          %v693 = vmin.f32 %v581, %v677
          %v694 = vmin.f32 %v582, %v678
          %v695 = vmin.f32 %v583, %v679
          %v696 = vmin.f32 %v584, %v680
          %v697 = vmin.f32 %v585, %v681
          %v698 = vmin.f32 %v586, %v682
          %v699 = vmin.f32 %v587, %v683
          %v700 = vmin.f32 %v588, %v684
          %v701 = vmin.f32 %v589, %v685
          %v702 = vmin.f32 %v590, %v686
          %v703 = vmin.f32 %v591, %v687
          %v704 = vmin.f32 %v592, %v688
          %v705 = vmin.f32 %v593, %v689
          %v706 = vmin.f32 %v594, %v690
          %v707 = vsub.f32 %v659, %v691
          %v708 = vsub.f32 %v660, %v692
          %v709 = vsub.f32 %v661, %v693
          %v710 = vsub.f32 %v662, %v694
          %v711 = vsub.f32 %v663, %v695
          %v712 = vsub.f32 %v664, %v696
          %v713 = vsub.f32 %v665, %v697
          %v714 = vsub.f32 %v666, %v698
          %v715 = vsub.f32 %v667, %v699
          %v716 = vsub.f32 %v668, %v700
          %v717 = vsub.f32 %v669, %v701
          %v718 = vsub.f32 %v670, %v702
          %v719 = vsub.f32 %v671, %v703
          %v720 = vsub.f32 %v672, %v704
          %v721 = vsub.f32 %v673, %v705
          %v722 = vsub.f32 %v674, %v706
          %v723 = vmax.f32 %v707, 1e-05
          %v724 = vmax.f32 %v708, 1e-05
          %v725 = vmax.f32 %v709, 1e-05
          %v726 = vmax.f32 %v710, 1e-05
          %v727 = vmax.f32 %v711, 1e-05
          %v728 = vmax.f32 %v712, 1e-05
          %v729 = vmax.f32 %v713, 1e-05
          %v730 = vmax.f32 %v714, 1e-05
          %v731 = vmax.f32 %v715, 1e-05
          %v732 = vmax.f32 %v716, 1e-05
          %v733 = vmax.f32 %v717, 1e-05
          %v734 = vmax.f32 %v718, 1e-05
          %v735 = vmax.f32 %v719, 1e-05
          %v736 = vmax.f32 %v720, 1e-05
          %v737 = vmax.f32 %v721, 1e-05
          %v738 = vmax.f32 %v722, 1e-05
          %v739 = vrcp.pop 15.0
          %v740 = vmul.f32 15.0, %v739
          %v741 = vsub.f32 1.0, %v740
          %v742 = vmul.f32 %v739, %v741
          %v743 = vadd.f32 %v739, %v742
          %vm744 = vweird.f32 %v739
          %v745 = vsel %vm744, %v739, %v743
          %v746 = vmul.f32 %v723, %v745
          %v747 = vmul.f32 %v724, %v745
          %v748 = vmul.f32 %v725, %v745
          %v749 = vmul.f32 %v726, %v745
          %v750 = vmul.f32 %v727, %v745
          %v751 = vmul.f32 %v728, %v745
          %v752 = vmul.f32 %v729, %v745
          %v753 = vmul.f32 %v730, %v745
          %v754 = vmul.f32 %v731, %v745
          %v755 = vmul.f32 %v732, %v745
          %v756 = vmul.f32 %v733, %v745
          %v757 = vmul.f32 %v734, %v745
          %v758 = vmul.f32 %v735, %v745
          %v759 = vmul.f32 %v736, %v745
          %v760 = vmul.f32 %v737, %v745
          %v761 = vmul.f32 %v738, %v745
          %v762 = vrcp.pop %v746
          %v763 = vrcp.pop %v747
          %v764 = vrcp.pop %v748
          %v765 = vrcp.pop %v749
          %v766 = vrcp.pop %v750
          %v767 = vrcp.pop %v751
          %v768 = vrcp.pop %v752
          %v769 = vrcp.pop %v753
          %v770 = vrcp.pop %v754
          %v771 = vrcp.pop %v755
          %v772 = vrcp.pop %v756
          %v773 = vrcp.pop %v757
          %v774 = vrcp.pop %v758
          %v775 = vrcp.pop %v759
          %v776 = vrcp.pop %v760
          %v777 = vrcp.pop %v761
          %v778 = vsub.f32 0.0, %v691
          %v779 = vsub.f32 0.0, %v692
          %v780 = vsub.f32 0.0, %v693
          %v781 = vsub.f32 0.0, %v694
          %v782 = vsub.f32 0.0, %v695
          %v783 = vsub.f32 0.0, %v696
          %v784 = vsub.f32 0.0, %v697
          %v785 = vsub.f32 0.0, %v698
          %v786 = vsub.f32 0.0, %v699
          %v787 = vsub.f32 0.0, %v700
          %v788 = vsub.f32 0.0, %v701
          %v789 = vsub.f32 0.0, %v702
          %v790 = vsub.f32 0.0, %v703
          %v791 = vsub.f32 0.0, %v704
          %v792 = vsub.f32 0.0, %v705
          %v793 = vsub.f32 0.0, %v706
          %v794 = vmul.f32 %v778, %v762
          %v795 = vmul.f32 %v779, %v763
          %v796 = vmul.f32 %v780, %v764
          %v797 = vmul.f32 %v781, %v765
          %v798 = vmul.f32 %v782, %v766
          %v799 = vmul.f32 %v783, %v767
          %v800 = vmul.f32 %v784, %v768
          %v801 = vmul.f32 %v785, %v769
          %v802 = vmul.f32 %v786, %v770
          %v803 = vmul.f32 %v787, %v771
          %v804 = vmul.f32 %v788, %v772
          %v805 = vmul.f32 %v789, %v773
          %v806 = vmul.f32 %v790, %v774
          %v807 = vmul.f32 %v791, %v775
          %v808 = vmul.f32 %v792, %v776
          %v809 = vmul.f32 %v793, %v777
          %v810 = vround.ne.pseudo %v794
          %v811 = vround.ne.pseudo %v795
          %v812 = vround.ne.pseudo %v796
          %v813 = vround.ne.pseudo %v797
          %v814 = vround.ne.pseudo %v798
          %v815 = vround.ne.pseudo %v799
          %v816 = vround.ne.pseudo %v800
          %v817 = vround.ne.pseudo %v801
          %v818 = vround.ne.pseudo %v802
          %v819 = vround.ne.pseudo %v803
          %v820 = vround.ne.pseudo %v804
          %v821 = vround.ne.pseudo %v805
          %v822 = vround.ne.pseudo %v806
          %v823 = vround.ne.pseudo %v807
          %v824 = vround.ne.pseudo %v808
          %v825 = vround.ne.pseudo %v809
          %v826 = vmax.f32 %v810, 0.0
          %v827 = vmax.f32 %v811, 0.0
          %v828 = vmax.f32 %v812, 0.0
          %v829 = vmax.f32 %v813, 0.0
          %v830 = vmax.f32 %v814, 0.0
          %v831 = vmax.f32 %v815, 0.0
          %v832 = vmax.f32 %v816, 0.0
          %v833 = vmax.f32 %v817, 0.0
          %v834 = vmax.f32 %v818, 0.0
          %v835 = vmax.f32 %v819, 0.0
          %v836 = vmax.f32 %v820, 0.0
          %v837 = vmax.f32 %v821, 0.0
          %v838 = vmax.f32 %v822, 0.0
          %v839 = vmax.f32 %v823, 0.0
          %v840 = vmax.f32 %v824, 0.0
          %v841 = vmax.f32 %v825, 0.0
          %v842 = vmin.f32 %v826, 15.0
          %v843 = vmin.f32 %v827, 15.0
          %v844 = vmin.f32 %v828, 15.0
          %v845 = vmin.f32 %v829, 15.0
          %v846 = vmin.f32 %v830, 15.0
          %v847 = vmin.f32 %v831, 15.0
          %v848 = vmin.f32 %v832, 15.0
          %v849 = vmin.f32 %v833, 15.0
          %v850 = vmin.f32 %v834, 15.0
          %v851 = vmin.f32 %v835, 15.0
          %v852 = vmin.f32 %v836, 15.0
          %v853 = vmin.f32 %v837, 15.0
          %v854 = vmin.f32 %v838, 15.0
          %v855 = vmin.f32 %v839, 15.0
          %v856 = vmin.f32 %v840, 15.0
          %v857 = vmin.f32 %v841, 15.0
          %v858 = vmul.f32 %v627, %v762
          %v859 = vmul.f32 %v628, %v763
          %v860 = vmul.f32 %v629, %v764
          %v861 = vmul.f32 %v630, %v765
          %v862 = vmul.f32 %v631, %v766
          %v863 = vmul.f32 %v632, %v767
          %v864 = vmul.f32 %v633, %v768
          %v865 = vmul.f32 %v634, %v769
          %v866 = vmul.f32 %v635, %v770
          %v867 = vmul.f32 %v636, %v771
          %v868 = vmul.f32 %v637, %v772
          %v869 = vmul.f32 %v638, %v773
          %v870 = vmul.f32 %v639, %v774
          %v871 = vmul.f32 %v640, %v775
          %v872 = vmul.f32 %v641, %v776
          %v873 = vmul.f32 %v642, %v777
          %v874 = vround.ne.pseudo %v858
          %v875 = vround.ne.pseudo %v859
          %v876 = vround.ne.pseudo %v860
          %v877 = vround.ne.pseudo %v861
          %v878 = vround.ne.pseudo %v862
          %v879 = vround.ne.pseudo %v863
          %v880 = vround.ne.pseudo %v864
          %v881 = vround.ne.pseudo %v865
          %v882 = vround.ne.pseudo %v866
          %v883 = vround.ne.pseudo %v867
          %v884 = vround.ne.pseudo %v868
          %v885 = vround.ne.pseudo %v869
          %v886 = vround.ne.pseudo %v870
          %v887 = vround.ne.pseudo %v871
          %v888 = vround.ne.pseudo %v872
          %v889 = vround.ne.pseudo %v873
          %v890 = vadd.f32 %v874, %v842
          %v891 = vadd.f32 %v875, %v843
          %v892 = vadd.f32 %v876, %v844
          %v893 = vadd.f32 %v877, %v845
          %v894 = vadd.f32 %v878, %v846
          %v895 = vadd.f32 %v879, %v847
          %v896 = vadd.f32 %v880, %v848
          %v897 = vadd.f32 %v881, %v849
          %v898 = vadd.f32 %v882, %v850
          %v899 = vadd.f32 %v883, %v851
          %v900 = vadd.f32 %v884, %v852
          %v901 = vadd.f32 %v885, %v853
          %v902 = vadd.f32 %v886, %v854
          %v903 = vadd.f32 %v887, %v855
          %v904 = vadd.f32 %v888, %v856
          %v905 = vadd.f32 %v889, %v857
          %v906 = vmax.f32 %v890, 0.0
          %v907 = vmax.f32 %v891, 0.0
          %v908 = vmax.f32 %v892, 0.0
          %v909 = vmax.f32 %v893, 0.0
          %v910 = vmax.f32 %v894, 0.0
          %v911 = vmax.f32 %v895, 0.0
          %v912 = vmax.f32 %v896, 0.0
          %v913 = vmax.f32 %v897, 0.0
          %v914 = vmax.f32 %v898, 0.0
          %v915 = vmax.f32 %v899, 0.0
          %v916 = vmax.f32 %v900, 0.0
          %v917 = vmax.f32 %v901, 0.0
          %v918 = vmax.f32 %v902, 0.0
          %v919 = vmax.f32 %v903, 0.0
          %v920 = vmax.f32 %v904, 0.0
          %v921 = vmax.f32 %v905, 0.0
          %v922 = vmin.f32 %v906, 15.0
          %v923 = vmin.f32 %v907, 15.0
          %v924 = vmin.f32 %v908, 15.0
          %v925 = vmin.f32 %v909, 15.0
          %v926 = vmin.f32 %v910, 15.0
          %v927 = vmin.f32 %v911, 15.0
          %v928 = vmin.f32 %v912, 15.0
          %v929 = vmin.f32 %v913, 15.0
          %v930 = vmin.f32 %v914, 15.0
          %v931 = vmin.f32 %v915, 15.0
          %v932 = vmin.f32 %v916, 15.0
          %v933 = vmin.f32 %v917, 15.0
          %v934 = vmin.f32 %v918, 15.0
          %v935 = vmin.f32 %v919, 15.0
          %v936 = vmin.f32 %v920, 15.0
          %v937 = vmin.f32 %v921, 15.0
          %v938 = vsub.f32 %v922, %v842
          %v939 = vsub.f32 %v923, %v843
          %v940 = vsub.f32 %v924, %v844
          %v941 = vsub.f32 %v925, %v845
          %v942 = vsub.f32 %v926, %v846
          %v943 = vsub.f32 %v927, %v847
          %v944 = vsub.f32 %v928, %v848
          %v945 = vsub.f32 %v929, %v849
          %v946 = vsub.f32 %v930, %v850
          %v947 = vsub.f32 %v931, %v851
          %v948 = vsub.f32 %v932, %v852
          %v949 = vsub.f32 %v933, %v853
          %v950 = vsub.f32 %v934, %v854
          %v951 = vsub.f32 %v935, %v855
          %v952 = vsub.f32 %v936, %v856
          %v953 = vsub.f32 %v937, %v857
          %v954 = vmul.f32 %v938, %v746
          %v955 = vmul.f32 %v939, %v747
          %v956 = vmul.f32 %v940, %v748
          %v957 = vmul.f32 %v941, %v749
          %v958 = vmul.f32 %v942, %v750
          %v959 = vmul.f32 %v943, %v751
          %v960 = vmul.f32 %v944, %v752
          %v961 = vmul.f32 %v945, %v753
          %v962 = vmul.f32 %v946, %v754
          %v963 = vmul.f32 %v947, %v755
          %v964 = vmul.f32 %v948, %v756
          %v965 = vmul.f32 %v949, %v757
          %v966 = vmul.f32 %v950, %v758
          %v967 = vmul.f32 %v951, %v759
          %v968 = vmul.f32 %v952, %v760
          %v969 = vmul.f32 %v953, %v761
          %v970 = vsub.f32 %v954, %v380
          %v971 = vsub.f32 %v955, %v381
          %v972 = vsub.f32 %v956, %v382
          %v973 = vsub.f32 %v957, %v383
          %v974 = vsub.f32 %v958, %v384
          %v975 = vsub.f32 %v959, %v385
          %v976 = vsub.f32 %v960, %v386
          %v977 = vsub.f32 %v961, %v387
          %v978 = vsub.f32 %v962, %v388
          %v979 = vsub.f32 %v963, %v389
          %v980 = vsub.f32 %v964, %v390
          %v981 = vsub.f32 %v965, %v391
          %v982 = vsub.f32 %v966, %v392
          %v983 = vsub.f32 %v967, %v393
          %v984 = vsub.f32 %v968, %v394
          %v985 = vsub.f32 %v969, %v395
          %v986 = vpack.c.bf16 %v970, %v970
          %v987 = vpack.c.bf16 %v971, %v971
          %v988 = vpack.c.bf16 %v972, %v972
          %v989 = vpack.c.bf16 %v973, %v973
          %v990 = vpack.c.bf16 %v974, %v974
          %v991 = vpack.c.bf16 %v975, %v975
          %v992 = vpack.c.bf16 %v976, %v976
          %v993 = vpack.c.bf16 %v977, %v977
          %v994 = vpack.c.bf16 %v978, %v978
          %v995 = vpack.c.bf16 %v979, %v979
          %v996 = vpack.c.bf16 %v980, %v980
          %v997 = vpack.c.bf16 %v981, %v981
          %v998 = vpack.c.bf16 %v982, %v982
          %v999 = vpack.c.bf16 %v983, %v983
          %v1000 = vpack.c.bf16 %v984, %v984
          %v1001 = vpack.c.bf16 %v985, %v985
          %v1006 = vunpack.c.l.b16 %v986
          %v1007 = vunpack.c.l.b16 %v987
          %v1008 = vunpack.c.l.b16 %v988
          %v1009 = vunpack.c.l.b16 %v989
          %v1010 = vpack.c.b16 %v1007, %v1006
          %v1011 = vpack.c.b16 %v1009, %v1008
          %v1013 = vsel %vm396, %v1010, 0
          %v1016 = vsel %vm396, %v1011, 0
          %vm1018 = vcmask 1043456
          %v1020 = vsel %vm1018, %v525, 0
          %1022 = vmatpush.bf16.msra.mxu0 0
          %1023 = vmatpush.bf16.msra.mxu0 0
          %1024 = vmatpush.bf16.msra.mxu0 0
          %1025 = vmatpush.bf16.msra.mxu0 0
          %1026 = vmatpush.bf16.msra.mxu0 0
          %1027 = vmatpush.bf16.msra.mxu0 0
          %1028 = vmatpush.bf16.msra.mxu0 0
          %1029 = vmatpush.bf16.msra.mxu0 %v1020
          %1030 = vmatmul.bf16.gmra.mxu0 %v1013
          %v1031 = vpop.f32.mrf.mxu0
          %v1032 = vadd.f32 0.0, %v1031
          %v1033 = vpop.f32.mrf.mxu0
          %v1034 = vadd.f32 0.0, %v1033
          %1035 = vmatmul.bf16.gmra.mxu0 %v1016
          %v1036 = vpop.f32.mrf.mxu0
          %v1037 = vadd.f32 0.0, %v1036
          %v1038 = vpop.f32.mrf.mxu0
          %v1039 = vadd.f32 0.0, %v1038
          %1040 = vdwg.mxu0
          %v1045 = vunpack.c.l.b16 %v990
          %v1046 = vunpack.c.l.b16 %v991
          %v1047 = vunpack.c.l.b16 %v992
          %v1048 = vunpack.c.l.b16 %v993
          %v1049 = vpack.c.b16 %v1046, %v1045
          %v1050 = vpack.c.b16 %v1048, %v1047
          %v1052 = vsel %vm396, %v1049, 0
          %v1055 = vsel %vm396, %v1050, 0
          %v1058 = vsel %vm1018, %v526, 0
          %1060 = vmatpush.bf16.msra.mxu0 0
          %1061 = vmatpush.bf16.msra.mxu0 0
          %1062 = vmatpush.bf16.msra.mxu0 0
          %1063 = vmatpush.bf16.msra.mxu0 0
          %1064 = vmatpush.bf16.msra.mxu0 0
          %1065 = vmatpush.bf16.msra.mxu0 0
          %1066 = vmatpush.bf16.msra.mxu0 0
          %1067 = vmatpush.bf16.msra.mxu0 %v1058
          %1068 = vmatmul.bf16.gmra.mxu0 %v1052
          %v1069 = vpop.f32.mrf.mxu0
          %v1070 = vadd.f32 0.0, %v1069
          %v1071 = vpop.f32.mrf.mxu0
          %v1072 = vadd.f32 0.0, %v1071
          %1073 = vmatmul.bf16.gmra.mxu0 %v1055
          %v1074 = vpop.f32.mrf.mxu0
          %v1075 = vadd.f32 0.0, %v1074
          %v1076 = vpop.f32.mrf.mxu0
          %v1077 = vadd.f32 0.0, %v1076
          %1078 = vdwg.mxu0
          %v1083 = vunpack.c.l.b16 %v994
          %v1084 = vunpack.c.l.b16 %v995
          %v1085 = vunpack.c.l.b16 %v996
          %v1086 = vunpack.c.l.b16 %v997
          %v1087 = vpack.c.b16 %v1084, %v1083
          %v1088 = vpack.c.b16 %v1086, %v1085
          %v1090 = vsel %vm396, %v1087, 0
          %v1093 = vsel %vm396, %v1088, 0
          %v1096 = vsel %vm1018, %v527, 0
          %1098 = vmatpush.bf16.msra.mxu0 0
          %1099 = vmatpush.bf16.msra.mxu0 0
          %1100 = vmatpush.bf16.msra.mxu0 0
          %1101 = vmatpush.bf16.msra.mxu0 0
          %1102 = vmatpush.bf16.msra.mxu0 0
          %1103 = vmatpush.bf16.msra.mxu0 0
          %1104 = vmatpush.bf16.msra.mxu0 0
          %1105 = vmatpush.bf16.msra.mxu0 %v1096
          %1106 = vmatmul.bf16.gmra.mxu0 %v1090
          %v1107 = vpop.f32.mrf.mxu0
          %v1108 = vadd.f32 0.0, %v1107
          %v1109 = vpop.f32.mrf.mxu0
          %v1110 = vadd.f32 0.0, %v1109
          %1111 = vmatmul.bf16.gmra.mxu0 %v1093
          %v1112 = vpop.f32.mrf.mxu0
          %v1113 = vadd.f32 0.0, %v1112
          %v1114 = vpop.f32.mrf.mxu0
          %v1115 = vadd.f32 0.0, %v1114
          %1116 = vdwg.mxu0
          %v1121 = vunpack.c.l.b16 %v998
          %v1122 = vunpack.c.l.b16 %v999
          %v1123 = vunpack.c.l.b16 %v1000
          %v1124 = vunpack.c.l.b16 %v1001
          %v1125 = vpack.c.b16 %v1122, %v1121
          %v1126 = vpack.c.b16 %v1124, %v1123
          %v1128 = vsel %vm396, %v1125, 0
          %v1131 = vsel %vm396, %v1126, 0
          %v1134 = vsel %vm1018, %v528, 0
          %1136 = vmatpush.bf16.msra.mxu0 0
          %1137 = vmatpush.bf16.msra.mxu0 0
          %1138 = vmatpush.bf16.msra.mxu0 0
          %1139 = vmatpush.bf16.msra.mxu0 0
          %1140 = vmatpush.bf16.msra.mxu0 0
          %1141 = vmatpush.bf16.msra.mxu0 0
          %1142 = vmatpush.bf16.msra.mxu0 0
          %1143 = vmatpush.bf16.msra.mxu0 %v1134
          %1144 = vmatmul.bf16.gmra.mxu0 %v1128
          %v1145 = vpop.f32.mrf.mxu0
          %v1146 = vadd.f32 0.0, %v1145
          %v1147 = vpop.f32.mrf.mxu0
          %v1148 = vadd.f32 0.0, %v1147
          %1149 = vmatmul.bf16.gmra.mxu0 %v1131
          %v1150 = vpop.f32.mrf.mxu0
          %v1151 = vadd.f32 0.0, %v1150
          %v1152 = vpop.f32.mrf.mxu0
          %v1153 = vadd.f32 0.0, %v1152
          %1154 = vdwg.mxu0
          %v1155 = vmul.f32 %v1032, %v970
          %v1156 = vmul.f32 %v1034, %v971
          %v1157 = vmul.f32 %v1037, %v972
          %v1158 = vmul.f32 %v1039, %v973
          %v1159 = vmul.f32 %v1070, %v974
          %v1160 = vmul.f32 %v1072, %v975
          %v1161 = vmul.f32 %v1075, %v976
          %v1162 = vmul.f32 %v1077, %v977
          %v1163 = vmul.f32 %v1108, %v978
          %v1164 = vmul.f32 %v1110, %v979
          %v1165 = vmul.f32 %v1113, %v980
          %v1166 = vmul.f32 %v1115, %v981
          %v1167 = vmul.f32 %v1146, %v982
          %v1168 = vmul.f32 %v1148, %v983
          %v1169 = vmul.f32 %v1151, %v984
          %v1170 = vmul.f32 %v1153, %v985
          %v1171 = vsel %vm396, %v1155, 0.0
          %1172 = vadd.xlane.f32.xlu0 %v1171
          %v1173 = vpop.xlane.xlu0 %1172
          %v1174 = vsel %vm396, %v1156, 0.0
          %1175 = vadd.xlane.f32.xlu0 %v1174
          %v1176 = vpop.xlane.xlu0 %1175
          %v1177 = vsel %vm396, %v1157, 0.0
          %1178 = vadd.xlane.f32.xlu0 %v1177
          %v1179 = vpop.xlane.xlu0 %1178
          %v1180 = vsel %vm396, %v1158, 0.0
          %1181 = vadd.xlane.f32.xlu0 %v1180
          %v1182 = vpop.xlane.xlu0 %1181
          %v1183 = vsel %vm396, %v1159, 0.0
          %1184 = vadd.xlane.f32.xlu0 %v1183
          %v1185 = vpop.xlane.xlu0 %1184
          %v1186 = vsel %vm396, %v1160, 0.0
          %1187 = vadd.xlane.f32.xlu0 %v1186
          %v1188 = vpop.xlane.xlu0 %1187
          %v1189 = vsel %vm396, %v1161, 0.0
          %1190 = vadd.xlane.f32.xlu0 %v1189
          %v1191 = vpop.xlane.xlu0 %1190
          %v1192 = vsel %vm396, %v1162, 0.0
          %1193 = vadd.xlane.f32.xlu0 %v1192
          %v1194 = vpop.xlane.xlu0 %1193
          %v1195 = vsel %vm396, %v1163, 0.0
          %1196 = vadd.xlane.f32.xlu0 %v1195
          %v1197 = vpop.xlane.xlu0 %1196
          %v1198 = vsel %vm396, %v1164, 0.0
          %1199 = vadd.xlane.f32.xlu0 %v1198
          %v1200 = vpop.xlane.xlu0 %1199
          %v1201 = vsel %vm396, %v1165, 0.0
          %1202 = vadd.xlane.f32.xlu0 %v1201
          %v1203 = vpop.xlane.xlu0 %1202
          %v1204 = vsel %vm396, %v1166, 0.0
          %1205 = vadd.xlane.f32.xlu0 %v1204
          %v1206 = vpop.xlane.xlu0 %1205
          %v1207 = vsel %vm396, %v1167, 0.0
          %1208 = vadd.xlane.f32.xlu0 %v1207
          %v1209 = vpop.xlane.xlu0 %1208
          %v1210 = vsel %vm396, %v1168, 0.0
          %1211 = vadd.xlane.f32.xlu0 %v1210
          %v1212 = vpop.xlane.xlu0 %1211
          %v1213 = vsel %vm396, %v1169, 0.0
          %1214 = vadd.xlane.f32.xlu0 %v1213
          %v1215 = vpop.xlane.xlu0 %1214
          %v1216 = vsel %vm396, %v1170, 0.0
          %1217 = vadd.xlane.f32.xlu0 %v1216
          %v1218 = vpop.xlane.xlu0 %1217
          %vm1219 = vcmp.lt.f32.partialorder %v1173, %v535
          %vm1220 = vcmp.lt.f32.partialorder %v1176, %v536
          %vm1221 = vcmp.lt.f32.partialorder %v1179, %v537
          %vm1222 = vcmp.lt.f32.partialorder %v1182, %v538
          %vm1223 = vcmp.lt.f32.partialorder %v1185, %v539
          %vm1224 = vcmp.lt.f32.partialorder %v1188, %v540
          %vm1225 = vcmp.lt.f32.partialorder %v1191, %v541
          %vm1226 = vcmp.lt.f32.partialorder %v1194, %v542
          %vm1227 = vcmp.lt.f32.partialorder %v1197, %v543
          %vm1228 = vcmp.lt.f32.partialorder %v1200, %v544
          %vm1229 = vcmp.lt.f32.partialorder %v1203, %v545
          %vm1230 = vcmp.lt.f32.partialorder %v1206, %v546
          %vm1231 = vcmp.lt.f32.partialorder %v1209, %v547
          %vm1232 = vcmp.lt.f32.partialorder %v1212, %v548
          %vm1233 = vcmp.lt.f32.partialorder %v1215, %v549
          %vm1234 = vcmp.lt.f32.partialorder %v1218, %v550
          %v1235 = vsel %vm1219, %v1173, %v535
          %v1236 = vsel %vm1220, %v1176, %v536
          %v1237 = vsel %vm1221, %v1179, %v537
          %v1238 = vsel %vm1222, %v1182, %v538
          %v1239 = vsel %vm1223, %v1185, %v539
          %v1240 = vsel %vm1224, %v1188, %v540
          %v1241 = vsel %vm1225, %v1191, %v541
          %v1242 = vsel %vm1226, %v1194, %v542
          %v1243 = vsel %vm1227, %v1197, %v543
          %v1244 = vsel %vm1228, %v1200, %v544
          %v1245 = vsel %vm1229, %v1203, %v545
          %v1246 = vsel %vm1230, %v1206, %v546
          %v1247 = vsel %vm1231, %v1209, %v547
          %v1248 = vsel %vm1232, %v1212, %v548
          %v1249 = vsel %vm1233, %v1215, %v549
          %v1250 = vsel %vm1234, %v1218, %v550
          %v1251 = vsel %vm1219, %v579, %v551
          %v1252 = vsel %vm1220, %v580, %v552
          %v1253 = vsel %vm1221, %v581, %v553
          %v1254 = vsel %vm1222, %v582, %v554
          %v1255 = vsel %vm1223, %v583, %v555
          %v1256 = vsel %vm1224, %v584, %v556
          %v1257 = vsel %vm1225, %v585, %v557
          %v1258 = vsel %vm1226, %v586, %v558
          %v1259 = vsel %vm1227, %v587, %v559
          %v1260 = vsel %vm1228, %v588, %v560
          %v1261 = vsel %vm1229, %v589, %v561
          %v1262 = vsel %vm1230, %v590, %v562
          %v1263 = vsel %vm1231, %v591, %v563
          %v1264 = vsel %vm1232, %v592, %v564
          %v1265 = vsel %vm1233, %v593, %v565
          %v1266 = vsel %vm1234, %v594, %v566
        $region33: #{tpu_custom_call.1} parent=27 // loop_footer
          %s534 = sadd.s32 1, %s530
        $region34: #{tpu_custom_call.1} parent=27 // loop_footer_branch
          %529 = sbr.rel target = $region30
        $region35: #{tpu_custom_call.1} parent=27 // loop_exit
          _
        %v1267 = vsub.f32 0.0, %v551
        %v1268 = vsub.f32 0.0, %v552
        %v1269 = vsub.f32 0.0, %v553
        %v1270 = vsub.f32 0.0, %v554
        %v1271 = vsub.f32 0.0, %v555
        %v1272 = vsub.f32 0.0, %v556
        %v1273 = vsub.f32 0.0, %v557
        %v1274 = vsub.f32 0.0, %v558
        %v1275 = vsub.f32 0.0, %v559
        %v1276 = vsub.f32 0.0, %v560
        %v1277 = vsub.f32 0.0, %v561
        %v1278 = vsub.f32 0.0, %v562
        %v1279 = vsub.f32 0.0, %v563
        %v1280 = vsub.f32 0.0, %v564
        %v1281 = vsub.f32 0.0, %v565
        %v1282 = vsub.f32 0.0, %v566
        %v1283 = vmax.f32 %v1267, %v380
        %v1284 = vmax.f32 %v1268, %v381
        %v1285 = vmax.f32 %v1269, %v382
        %v1286 = vmax.f32 %v1270, %v383
        %v1287 = vmax.f32 %v1271, %v384
        %v1288 = vmax.f32 %v1272, %v385
        %v1289 = vmax.f32 %v1273, %v386
        %v1290 = vmax.f32 %v1274, %v387
        %v1291 = vmax.f32 %v1275, %v388
        %v1292 = vmax.f32 %v1276, %v389
        %v1293 = vmax.f32 %v1277, %v390
        %v1294 = vmax.f32 %v1278, %v391
        %v1295 = vmax.f32 %v1279, %v392
        %v1296 = vmax.f32 %v1280, %v393
        %v1297 = vmax.f32 %v1281, %v394
        %v1298 = vmax.f32 %v1282, %v395
        %v1299 = vmin.f32 %v551, %v1283
        %v1300 = vmin.f32 %v552, %v1284
        %v1301 = vmin.f32 %v553, %v1285
        %v1302 = vmin.f32 %v554, %v1286
        %v1303 = vmin.f32 %v555, %v1287
        %v1304 = vmin.f32 %v556, %v1288
        %v1305 = vmin.f32 %v557, %v1289
        %v1306 = vmin.f32 %v558, %v1290
        %v1307 = vmin.f32 %v559, %v1291
        %v1308 = vmin.f32 %v560, %v1292
        %v1309 = vmin.f32 %v561, %v1293
        %v1310 = vmin.f32 %v562, %v1294
        %v1311 = vmin.f32 %v563, %v1295
        %v1312 = vmin.f32 %v564, %v1296
        %v1313 = vmin.f32 %v565, %v1297
        %v1314 = vmin.f32 %v566, %v1298
        %v1315 = vmax.f32 %v1267, %v399
        %v1316 = vmax.f32 %v1268, %v402
        %v1317 = vmax.f32 %v1269, %v405
        %v1318 = vmax.f32 %v1270, %v408
        %v1319 = vmax.f32 %v1271, %v411
        %v1320 = vmax.f32 %v1272, %v414
        %v1321 = vmax.f32 %v1273, %v417
        %v1322 = vmax.f32 %v1274, %v420
        %v1323 = vmax.f32 %v1275, %v423
        %v1324 = vmax.f32 %v1276, %v426
        %v1325 = vmax.f32 %v1277, %v429
        %v1326 = vmax.f32 %v1278, %v432
        %v1327 = vmax.f32 %v1279, %v435
        %v1328 = vmax.f32 %v1280, %v438
        %v1329 = vmax.f32 %v1281, %v441
        %v1330 = vmax.f32 %v1282, %v444
        %v1331 = vmin.f32 %v551, %v1315
        %v1332 = vmin.f32 %v552, %v1316
        %v1333 = vmin.f32 %v553, %v1317
        %v1334 = vmin.f32 %v554, %v1318
        %v1335 = vmin.f32 %v555, %v1319
        %v1336 = vmin.f32 %v556, %v1320
        %v1337 = vmin.f32 %v557, %v1321
        %v1338 = vmin.f32 %v558, %v1322
        %v1339 = vmin.f32 %v559, %v1323
        %v1340 = vmin.f32 %v560, %v1324
        %v1341 = vmin.f32 %v561, %v1325
        %v1342 = vmin.f32 %v562, %v1326
        %v1343 = vmin.f32 %v563, %v1327
        %v1344 = vmin.f32 %v564, %v1328
        %v1345 = vmin.f32 %v565, %v1329
        %v1346 = vmin.f32 %v566, %v1330
        %v1347 = vmax.f32 %v1267, %v447
        %v1348 = vmax.f32 %v1268, %v450
        %v1349 = vmax.f32 %v1269, %v453
        %v1350 = vmax.f32 %v1270, %v456
        %v1351 = vmax.f32 %v1271, %v459
        %v1352 = vmax.f32 %v1272, %v462
        %v1353 = vmax.f32 %v1273, %v465
        %v1354 = vmax.f32 %v1274, %v468
        %v1355 = vmax.f32 %v1275, %v471
        %v1356 = vmax.f32 %v1276, %v474
        %v1357 = vmax.f32 %v1277, %v477
        %v1358 = vmax.f32 %v1278, %v480
        %v1359 = vmax.f32 %v1279, %v483
        %v1360 = vmax.f32 %v1280, %v486
        %v1361 = vmax.f32 %v1281, %v489
        %v1362 = vmax.f32 %v1282, %v492
        %v1363 = vmin.f32 %v551, %v1347
        %v1364 = vmin.f32 %v552, %v1348
        %v1365 = vmin.f32 %v553, %v1349
        %v1366 = vmin.f32 %v554, %v1350
        %v1367 = vmin.f32 %v555, %v1351
        %v1368 = vmin.f32 %v556, %v1352
        %v1369 = vmin.f32 %v557, %v1353
        %v1370 = vmin.f32 %v558, %v1354
        %v1371 = vmin.f32 %v559, %v1355
        %v1372 = vmin.f32 %v560, %v1356
        %v1373 = vmin.f32 %v561, %v1357
        %v1374 = vmin.f32 %v562, %v1358
        %v1375 = vmin.f32 %v563, %v1359
        %v1376 = vmin.f32 %v564, %v1360
        %v1377 = vmin.f32 %v565, %v1361
        %v1378 = vmin.f32 %v566, %v1362
        %v1379 = vsub.f32 %v1331, %v1363
        %v1380 = vsub.f32 %v1332, %v1364
        %v1381 = vsub.f32 %v1333, %v1365
        %v1382 = vsub.f32 %v1334, %v1366
        %v1383 = vsub.f32 %v1335, %v1367
        %v1384 = vsub.f32 %v1336, %v1368
        %v1385 = vsub.f32 %v1337, %v1369
        %v1386 = vsub.f32 %v1338, %v1370
        %v1387 = vsub.f32 %v1339, %v1371
        %v1388 = vsub.f32 %v1340, %v1372
        %v1389 = vsub.f32 %v1341, %v1373
        %v1390 = vsub.f32 %v1342, %v1374
        %v1391 = vsub.f32 %v1343, %v1375
        %v1392 = vsub.f32 %v1344, %v1376
        %v1393 = vsub.f32 %v1345, %v1377
        %v1394 = vsub.f32 %v1346, %v1378
        %v1395 = vmax.f32 %v1379, 1e-05
        %v1396 = vmax.f32 %v1380, 1e-05
        %v1397 = vmax.f32 %v1381, 1e-05
        %v1398 = vmax.f32 %v1382, 1e-05
        %v1399 = vmax.f32 %v1383, 1e-05
        %v1400 = vmax.f32 %v1384, 1e-05
        %v1401 = vmax.f32 %v1385, 1e-05
        %v1402 = vmax.f32 %v1386, 1e-05
        %v1403 = vmax.f32 %v1387, 1e-05
        %v1404 = vmax.f32 %v1388, 1e-05
        %v1405 = vmax.f32 %v1389, 1e-05
        %v1406 = vmax.f32 %v1390, 1e-05
        %v1407 = vmax.f32 %v1391, 1e-05
        %v1408 = vmax.f32 %v1392, 1e-05
        %v1409 = vmax.f32 %v1393, 1e-05
        %v1410 = vmax.f32 %v1394, 1e-05
        %v1411 = vrcp.pop 15.0
        %v1412 = vmul.f32 15.0, %v1411
        %v1413 = vsub.f32 1.0, %v1412
        %v1414 = vmul.f32 %v1411, %v1413
        %v1415 = vadd.f32 %v1411, %v1414
        %vm1416 = vweird.f32 %v1411
        %v1417 = vsel %vm1416, %v1411, %v1415
        %v1418 = vmul.f32 %v1395, %v1417
        %v1419 = vmul.f32 %v1396, %v1417
        %v1420 = vmul.f32 %v1397, %v1417
        %v1421 = vmul.f32 %v1398, %v1417
        %v1422 = vmul.f32 %v1399, %v1417
        %v1423 = vmul.f32 %v1400, %v1417
        %v1424 = vmul.f32 %v1401, %v1417
        %v1425 = vmul.f32 %v1402, %v1417
        %v1426 = vmul.f32 %v1403, %v1417
        %v1427 = vmul.f32 %v1404, %v1417
        %v1428 = vmul.f32 %v1405, %v1417
        %v1429 = vmul.f32 %v1406, %v1417
        %v1430 = vmul.f32 %v1407, %v1417
        %v1431 = vmul.f32 %v1408, %v1417
        %v1432 = vmul.f32 %v1409, %v1417
        %v1433 = vmul.f32 %v1410, %v1417
        %v1434 = vsub.f32 0.0, %v1363
        %v1435 = vsub.f32 0.0, %v1364
        %v1436 = vsub.f32 0.0, %v1365
        %v1437 = vsub.f32 0.0, %v1366
        %v1438 = vsub.f32 0.0, %v1367
        %v1439 = vsub.f32 0.0, %v1368
        %v1440 = vsub.f32 0.0, %v1369
        %v1441 = vsub.f32 0.0, %v1370
        %v1442 = vsub.f32 0.0, %v1371
        %v1443 = vsub.f32 0.0, %v1372
        %v1444 = vsub.f32 0.0, %v1373
        %v1445 = vsub.f32 0.0, %v1374
        %v1446 = vsub.f32 0.0, %v1375
        %v1447 = vsub.f32 0.0, %v1376
        %v1448 = vsub.f32 0.0, %v1377
        %v1449 = vsub.f32 0.0, %v1378
        %v1450 = vrcp.pop %v1418
        %v1451 = vmul.f32 %v1418, %v1450
        %v1452 = vsub.f32 1.0, %v1451
        %v1453 = vmul.f32 %v1450, %v1452
        %v1454 = vadd.f32 %v1450, %v1453
        %vm1455 = vweird.f32 %v1418
        %vm1456 = vweird.f32 %v1450
        %vm1457 = vmor %vm1455, %vm1456
        %v1458 = vsel %vm1457, %v1450, %v1454
        %v1459 = vand.u32 2147483647, %v1418
        %vm1460 = vcmp.eq.f32.partialorder %v1459, 8.507059e+37
        %v1461 = vand.u32 %v1418, 2147483648
        %v1462 = vor.u32 1.1754944e-38, %v1461
        %v1463 = vsel %vm1460, %v1462, %v1458
        %v1464 = vmul.f32 %v1434, %v1463
        %v1465 = vrcp.pop %v1419
        %v1466 = vmul.f32 %v1419, %v1465
        %v1467 = vsub.f32 1.0, %v1466
        %v1468 = vmul.f32 %v1465, %v1467
        %v1469 = vadd.f32 %v1465, %v1468
        %vm1470 = vweird.f32 %v1419
        %vm1471 = vweird.f32 %v1465
        %vm1472 = vmor %vm1470, %vm1471
        %v1473 = vsel %vm1472, %v1465, %v1469
        %v1474 = vand.u32 2147483647, %v1419
        %vm1475 = vcmp.eq.f32.partialorder %v1474, 8.507059e+37
        %v1476 = vand.u32 %v1419, 2147483648
        %v1477 = vor.u32 1.1754944e-38, %v1476
        %v1478 = vsel %vm1475, %v1477, %v1473
        %v1479 = vmul.f32 %v1435, %v1478
        %v1480 = vrcp.pop %v1420
        %v1481 = vmul.f32 %v1420, %v1480
        %v1482 = vsub.f32 1.0, %v1481
        %v1483 = vmul.f32 %v1480, %v1482
        %v1484 = vadd.f32 %v1480, %v1483
        %vm1485 = vweird.f32 %v1420
        %vm1486 = vweird.f32 %v1480
        %vm1487 = vmor %vm1485, %vm1486
        %v1488 = vsel %vm1487, %v1480, %v1484
        %v1489 = vand.u32 2147483647, %v1420
        %vm1490 = vcmp.eq.f32.partialorder %v1489, 8.507059e+37
        %v1491 = vand.u32 %v1420, 2147483648
        %v1492 = vor.u32 1.1754944e-38, %v1491
        %v1493 = vsel %vm1490, %v1492, %v1488
        %v1494 = vmul.f32 %v1436, %v1493
        %v1495 = vrcp.pop %v1421
        %v1496 = vmul.f32 %v1421, %v1495
        %v1497 = vsub.f32 1.0, %v1496
        %v1498 = vmul.f32 %v1495, %v1497
        %v1499 = vadd.f32 %v1495, %v1498
        %vm1500 = vweird.f32 %v1421
        %vm1501 = vweird.f32 %v1495
        %vm1502 = vmor %vm1500, %vm1501
        %v1503 = vsel %vm1502, %v1495, %v1499
        %v1504 = vand.u32 2147483647, %v1421
        %vm1505 = vcmp.eq.f32.partialorder %v1504, 8.507059e+37
        %v1506 = vand.u32 %v1421, 2147483648
        %v1507 = vor.u32 1.1754944e-38, %v1506
        %v1508 = vsel %vm1505, %v1507, %v1503
        %v1509 = vmul.f32 %v1437, %v1508
        %v1510 = vrcp.pop %v1422
        %v1511 = vmul.f32 %v1422, %v1510
        %v1512 = vsub.f32 1.0, %v1511
        %v1513 = vmul.f32 %v1510, %v1512
        %v1514 = vadd.f32 %v1510, %v1513
        %vm1515 = vweird.f32 %v1422
        %vm1516 = vweird.f32 %v1510
        %vm1517 = vmor %vm1515, %vm1516
        %v1518 = vsel %vm1517, %v1510, %v1514
        %v1519 = vand.u32 2147483647, %v1422
        %vm1520 = vcmp.eq.f32.partialorder %v1519, 8.507059e+37
        %v1521 = vand.u32 %v1422, 2147483648
        %v1522 = vor.u32 1.1754944e-38, %v1521
        %v1523 = vsel %vm1520, %v1522, %v1518
        %v1524 = vmul.f32 %v1438, %v1523
        %v1525 = vrcp.pop %v1423
        %v1526 = vmul.f32 %v1423, %v1525
        %v1527 = vsub.f32 1.0, %v1526
        %v1528 = vmul.f32 %v1525, %v1527
        %v1529 = vadd.f32 %v1525, %v1528
        %vm1530 = vweird.f32 %v1423
        %vm1531 = vweird.f32 %v1525
        %vm1532 = vmor %vm1530, %vm1531
        %v1533 = vsel %vm1532, %v1525, %v1529
        %v1534 = vand.u32 2147483647, %v1423
        %vm1535 = vcmp.eq.f32.partialorder %v1534, 8.507059e+37
        %v1536 = vand.u32 %v1423, 2147483648
        %v1537 = vor.u32 1.1754944e-38, %v1536
        %v1538 = vsel %vm1535, %v1537, %v1533
        %v1539 = vmul.f32 %v1439, %v1538
        %v1540 = vrcp.pop %v1424
        %v1541 = vmul.f32 %v1424, %v1540
        %v1542 = vsub.f32 1.0, %v1541
        %v1543 = vmul.f32 %v1540, %v1542
        %v1544 = vadd.f32 %v1540, %v1543
        %vm1545 = vweird.f32 %v1424
        %vm1546 = vweird.f32 %v1540
        %vm1547 = vmor %vm1545, %vm1546
        %v1548 = vsel %vm1547, %v1540, %v1544
        %v1549 = vand.u32 2147483647, %v1424
        %vm1550 = vcmp.eq.f32.partialorder %v1549, 8.507059e+37
        %v1551 = vand.u32 %v1424, 2147483648
        %v1552 = vor.u32 1.1754944e-38, %v1551
        %v1553 = vsel %vm1550, %v1552, %v1548
        %v1554 = vmul.f32 %v1440, %v1553
        %v1555 = vrcp.pop %v1425
        %v1556 = vmul.f32 %v1425, %v1555
        %v1557 = vsub.f32 1.0, %v1556
        %v1558 = vmul.f32 %v1555, %v1557
        %v1559 = vadd.f32 %v1555, %v1558
        %vm1560 = vweird.f32 %v1425
        %vm1561 = vweird.f32 %v1555
        %vm1562 = vmor %vm1560, %vm1561
        %v1563 = vsel %vm1562, %v1555, %v1559
        %v1564 = vand.u32 2147483647, %v1425
        %vm1565 = vcmp.eq.f32.partialorder %v1564, 8.507059e+37
        %v1566 = vand.u32 %v1425, 2147483648
        %v1567 = vor.u32 1.1754944e-38, %v1566
        %v1568 = vsel %vm1565, %v1567, %v1563
        %v1569 = vmul.f32 %v1441, %v1568
        %v1570 = vrcp.pop %v1426
        %v1571 = vmul.f32 %v1426, %v1570
        %v1572 = vsub.f32 1.0, %v1571
        %v1573 = vmul.f32 %v1570, %v1572
        %v1574 = vadd.f32 %v1570, %v1573
        %vm1575 = vweird.f32 %v1426
        %vm1576 = vweird.f32 %v1570
        %vm1577 = vmor %vm1575, %vm1576
        %v1578 = vsel %vm1577, %v1570, %v1574
        %v1579 = vand.u32 2147483647, %v1426
        %vm1580 = vcmp.eq.f32.partialorder %v1579, 8.507059e+37
        %v1581 = vand.u32 %v1426, 2147483648
        %v1582 = vor.u32 1.1754944e-38, %v1581
        %v1583 = vsel %vm1580, %v1582, %v1578
        %v1584 = vmul.f32 %v1442, %v1583
        %v1585 = vrcp.pop %v1427
        %v1586 = vmul.f32 %v1427, %v1585
        %v1587 = vsub.f32 1.0, %v1586
        %v1588 = vmul.f32 %v1585, %v1587
        %v1589 = vadd.f32 %v1585, %v1588
        %vm1590 = vweird.f32 %v1427
        %vm1591 = vweird.f32 %v1585
        %vm1592 = vmor %vm1590, %vm1591
        %v1593 = vsel %vm1592, %v1585, %v1589
        %v1594 = vand.u32 2147483647, %v1427
        %vm1595 = vcmp.eq.f32.partialorder %v1594, 8.507059e+37
        %v1596 = vand.u32 %v1427, 2147483648
        %v1597 = vor.u32 1.1754944e-38, %v1596
        %v1598 = vsel %vm1595, %v1597, %v1593
        %v1599 = vmul.f32 %v1443, %v1598
        %v1600 = vrcp.pop %v1428
        %v1601 = vmul.f32 %v1428, %v1600
        %v1602 = vsub.f32 1.0, %v1601
        %v1603 = vmul.f32 %v1600, %v1602
        %v1604 = vadd.f32 %v1600, %v1603
        %vm1605 = vweird.f32 %v1428
        %vm1606 = vweird.f32 %v1600
        %vm1607 = vmor %vm1605, %vm1606
        %v1608 = vsel %vm1607, %v1600, %v1604
        %v1609 = vand.u32 2147483647, %v1428
        %vm1610 = vcmp.eq.f32.partialorder %v1609, 8.507059e+37
        %v1611 = vand.u32 %v1428, 2147483648
        %v1612 = vor.u32 1.1754944e-38, %v1611
        %v1613 = vsel %vm1610, %v1612, %v1608
        %v1614 = vmul.f32 %v1444, %v1613
        %v1615 = vrcp.pop %v1429
        %v1616 = vmul.f32 %v1429, %v1615
        %v1617 = vsub.f32 1.0, %v1616
        %v1618 = vmul.f32 %v1615, %v1617
        %v1619 = vadd.f32 %v1615, %v1618
        %vm1620 = vweird.f32 %v1429
        %vm1621 = vweird.f32 %v1615
        %vm1622 = vmor %vm1620, %vm1621
        %v1623 = vsel %vm1622, %v1615, %v1619
        %v1624 = vand.u32 2147483647, %v1429
        %vm1625 = vcmp.eq.f32.partialorder %v1624, 8.507059e+37
        %v1626 = vand.u32 %v1429, 2147483648
        %v1627 = vor.u32 1.1754944e-38, %v1626
        %v1628 = vsel %vm1625, %v1627, %v1623
        %v1629 = vmul.f32 %v1445, %v1628
        %v1630 = vrcp.pop %v1430
        %v1631 = vmul.f32 %v1430, %v1630
        %v1632 = vsub.f32 1.0, %v1631
        %v1633 = vmul.f32 %v1630, %v1632
        %v1634 = vadd.f32 %v1630, %v1633
        %vm1635 = vweird.f32 %v1430
        %vm1636 = vweird.f32 %v1630
        %vm1637 = vmor %vm1635, %vm1636
        %v1638 = vsel %vm1637, %v1630, %v1634
        %v1639 = vand.u32 2147483647, %v1430
        %vm1640 = vcmp.eq.f32.partialorder %v1639, 8.507059e+37
        %v1641 = vand.u32 %v1430, 2147483648
        %v1642 = vor.u32 1.1754944e-38, %v1641
        %v1643 = vsel %vm1640, %v1642, %v1638
        %v1644 = vmul.f32 %v1446, %v1643
        %v1645 = vrcp.pop %v1431
        %v1646 = vmul.f32 %v1431, %v1645
        %v1647 = vsub.f32 1.0, %v1646
        %v1648 = vmul.f32 %v1645, %v1647
        %v1649 = vadd.f32 %v1645, %v1648
        %vm1650 = vweird.f32 %v1431
        %vm1651 = vweird.f32 %v1645
        %vm1652 = vmor %vm1650, %vm1651
        %v1653 = vsel %vm1652, %v1645, %v1649
        %v1654 = vand.u32 2147483647, %v1431
        %vm1655 = vcmp.eq.f32.partialorder %v1654, 8.507059e+37
        %v1656 = vand.u32 %v1431, 2147483648
        %v1657 = vor.u32 1.1754944e-38, %v1656
        %v1658 = vsel %vm1655, %v1657, %v1653
        %v1659 = vmul.f32 %v1447, %v1658
        %v1660 = vrcp.pop %v1432
        %v1661 = vmul.f32 %v1432, %v1660
        %v1662 = vsub.f32 1.0, %v1661
        %v1663 = vmul.f32 %v1660, %v1662
        %v1664 = vadd.f32 %v1660, %v1663
        %vm1665 = vweird.f32 %v1432
        %vm1666 = vweird.f32 %v1660
        %vm1667 = vmor %vm1665, %vm1666
        %v1668 = vsel %vm1667, %v1660, %v1664
        %v1669 = vand.u32 2147483647, %v1432
        %vm1670 = vcmp.eq.f32.partialorder %v1669, 8.507059e+37
        %v1671 = vand.u32 %v1432, 2147483648
        %v1672 = vor.u32 1.1754944e-38, %v1671
        %v1673 = vsel %vm1670, %v1672, %v1668
        %v1674 = vmul.f32 %v1448, %v1673
        %v1675 = vrcp.pop %v1433
        %v1676 = vmul.f32 %v1433, %v1675
        %v1677 = vsub.f32 1.0, %v1676
        %v1678 = vmul.f32 %v1675, %v1677
        %v1679 = vadd.f32 %v1675, %v1678
        %vm1680 = vweird.f32 %v1433
        %vm1681 = vweird.f32 %v1675
        %vm1682 = vmor %vm1680, %vm1681
        %v1683 = vsel %vm1682, %v1675, %v1679
        %v1684 = vand.u32 2147483647, %v1433
        %vm1685 = vcmp.eq.f32.partialorder %v1684, 8.507059e+37
        %v1686 = vand.u32 %v1433, 2147483648
        %v1687 = vor.u32 1.1754944e-38, %v1686
        %v1688 = vsel %vm1685, %v1687, %v1683
        %v1689 = vmul.f32 %v1449, %v1688
        %v1690 = vround.ne.pseudo %v1464
        %v1691 = vround.ne.pseudo %v1479
        %v1692 = vround.ne.pseudo %v1494
        %v1693 = vround.ne.pseudo %v1509
        %v1694 = vround.ne.pseudo %v1524
        %v1695 = vround.ne.pseudo %v1539
        %v1696 = vround.ne.pseudo %v1554
        %v1697 = vround.ne.pseudo %v1569
        %v1698 = vround.ne.pseudo %v1584
        %v1699 = vround.ne.pseudo %v1599
        %v1700 = vround.ne.pseudo %v1614
        %v1701 = vround.ne.pseudo %v1629
        %v1702 = vround.ne.pseudo %v1644
        %v1703 = vround.ne.pseudo %v1659
        %v1704 = vround.ne.pseudo %v1674
        %v1705 = vround.ne.pseudo %v1689
        %v1706 = vmax.f32 %v1690, 0.0
        %v1707 = vmax.f32 %v1691, 0.0
        %v1708 = vmax.f32 %v1692, 0.0
        %v1709 = vmax.f32 %v1693, 0.0
        %v1710 = vmax.f32 %v1694, 0.0
        %v1711 = vmax.f32 %v1695, 0.0
        %v1712 = vmax.f32 %v1696, 0.0
        %v1713 = vmax.f32 %v1697, 0.0
        %v1714 = vmax.f32 %v1698, 0.0
        %v1715 = vmax.f32 %v1699, 0.0
        %v1716 = vmax.f32 %v1700, 0.0
        %v1717 = vmax.f32 %v1701, 0.0
        %v1718 = vmax.f32 %v1702, 0.0
        %v1719 = vmax.f32 %v1703, 0.0
        %v1720 = vmax.f32 %v1704, 0.0
        %v1721 = vmax.f32 %v1705, 0.0
        %v1722 = vmin.f32 %v1706, 15.0
        %v1723 = vmin.f32 %v1707, 15.0
        %v1724 = vmin.f32 %v1708, 15.0
        %v1725 = vmin.f32 %v1709, 15.0
        %v1726 = vmin.f32 %v1710, 15.0
        %v1727 = vmin.f32 %v1711, 15.0
        %v1728 = vmin.f32 %v1712, 15.0
        %v1729 = vmin.f32 %v1713, 15.0
        %v1730 = vmin.f32 %v1714, 15.0
        %v1731 = vmin.f32 %v1715, 15.0
        %v1732 = vmin.f32 %v1716, 15.0
        %v1733 = vmin.f32 %v1717, 15.0
        %v1734 = vmin.f32 %v1718, 15.0
        %v1735 = vmin.f32 %v1719, 15.0
        %v1736 = vmin.f32 %v1720, 15.0
        %v1737 = vmin.f32 %v1721, 15.0
        %v1738 = vmul.f32 %v1299, %v1463
        %v1739 = vmul.f32 %v1300, %v1478
        %v1740 = vmul.f32 %v1301, %v1493
        %v1741 = vmul.f32 %v1302, %v1508
        %v1742 = vmul.f32 %v1303, %v1523
        %v1743 = vmul.f32 %v1304, %v1538
        %v1744 = vmul.f32 %v1305, %v1553
        %v1745 = vmul.f32 %v1306, %v1568
        %v1746 = vmul.f32 %v1307, %v1583
        %v1747 = vmul.f32 %v1308, %v1598
        %v1748 = vmul.f32 %v1309, %v1613
        %v1749 = vmul.f32 %v1310, %v1628
        %v1750 = vmul.f32 %v1311, %v1643
        %v1751 = vmul.f32 %v1312, %v1658
        %v1752 = vmul.f32 %v1313, %v1673
        %v1753 = vmul.f32 %v1314, %v1688
        %v1754 = vround.ne.pseudo %v1738
        %v1755 = vround.ne.pseudo %v1739
        %v1756 = vround.ne.pseudo %v1740
        %v1757 = vround.ne.pseudo %v1741
        %v1758 = vround.ne.pseudo %v1742
        %v1759 = vround.ne.pseudo %v1743
        %v1760 = vround.ne.pseudo %v1744
        %v1761 = vround.ne.pseudo %v1745
        %v1762 = vround.ne.pseudo %v1746
        %v1763 = vround.ne.pseudo %v1747
        %v1764 = vround.ne.pseudo %v1748
        %v1765 = vround.ne.pseudo %v1749
        %v1766 = vround.ne.pseudo %v1750
        %v1767 = vround.ne.pseudo %v1751
        %v1768 = vround.ne.pseudo %v1752
        %v1769 = vround.ne.pseudo %v1753
        %v1770 = vadd.f32 %v1754, %v1722
        %v1771 = vadd.f32 %v1755, %v1723
        %v1772 = vadd.f32 %v1756, %v1724
        %v1773 = vadd.f32 %v1757, %v1725
        %v1774 = vadd.f32 %v1758, %v1726
        %v1775 = vadd.f32 %v1759, %v1727
        %v1776 = vadd.f32 %v1760, %v1728
        %v1777 = vadd.f32 %v1761, %v1729
        %v1778 = vadd.f32 %v1762, %v1730
        %v1779 = vadd.f32 %v1763, %v1731
        %v1780 = vadd.f32 %v1764, %v1732
        %v1781 = vadd.f32 %v1765, %v1733
        %v1782 = vadd.f32 %v1766, %v1734
        %v1783 = vadd.f32 %v1767, %v1735
        %v1784 = vadd.f32 %v1768, %v1736
        %v1785 = vadd.f32 %v1769, %v1737
        %v1786 = vmax.f32 %v1770, 0.0
        %v1787 = vmax.f32 %v1771, 0.0
        %v1788 = vmax.f32 %v1772, 0.0
        %v1789 = vmax.f32 %v1773, 0.0
        %v1790 = vmax.f32 %v1774, 0.0
        %v1791 = vmax.f32 %v1775, 0.0
        %v1792 = vmax.f32 %v1776, 0.0
        %v1793 = vmax.f32 %v1777, 0.0
        %v1794 = vmax.f32 %v1778, 0.0
        %v1795 = vmax.f32 %v1779, 0.0
        %v1796 = vmax.f32 %v1780, 0.0
        %v1797 = vmax.f32 %v1781, 0.0
        %v1798 = vmax.f32 %v1782, 0.0
        %v1799 = vmax.f32 %v1783, 0.0
        %v1800 = vmax.f32 %v1784, 0.0
        %v1801 = vmax.f32 %v1785, 0.0
        %v1802 = vmin.f32 %v1786, 15.0
        %v1803 = vmin.f32 %v1787, 15.0
        %v1804 = vmin.f32 %v1788, 15.0
        %v1805 = vmin.f32 %v1789, 15.0
        %v1806 = vmin.f32 %v1790, 15.0
        %v1807 = vmin.f32 %v1791, 15.0
        %v1808 = vmin.f32 %v1792, 15.0
        %v1809 = vmin.f32 %v1793, 15.0
        %v1810 = vmin.f32 %v1794, 15.0
        %v1811 = vmin.f32 %v1795, 15.0
        %v1812 = vmin.f32 %v1796, 15.0
        %v1813 = vmin.f32 %v1797, 15.0
        %v1814 = vmin.f32 %v1798, 15.0
        %v1815 = vmin.f32 %v1799, 15.0
        %v1816 = vmin.f32 %v1800, 15.0
        %v1817 = vmin.f32 %v1801, 15.0
        %v1818 = vsub.f32 %v1802, %v1722
        %v1819 = vsub.f32 %v1803, %v1723
        %v1820 = vsub.f32 %v1804, %v1724
        %v1821 = vsub.f32 %v1805, %v1725
        %v1822 = vsub.f32 %v1806, %v1726
        %v1823 = vsub.f32 %v1807, %v1727
        %v1824 = vsub.f32 %v1808, %v1728
        %v1825 = vsub.f32 %v1809, %v1729
        %v1826 = vsub.f32 %v1810, %v1730
        %v1827 = vsub.f32 %v1811, %v1731
        %v1828 = vsub.f32 %v1812, %v1732
        %v1829 = vsub.f32 %v1813, %v1733
        %v1830 = vsub.f32 %v1814, %v1734
        %v1831 = vsub.f32 %v1815, %v1735
        %v1832 = vsub.f32 %v1816, %v1736
        %v1833 = vsub.f32 %v1817, %v1737
        %v1834 = vmul.f32 %v1818, %v1418
        %v1835 = vmul.f32 %v1819, %v1419
        %v1836 = vmul.f32 %v1820, %v1420
        %v1837 = vmul.f32 %v1821, %v1421
        %v1838 = vmul.f32 %v1822, %v1422
        %v1839 = vmul.f32 %v1823, %v1423
        %v1840 = vmul.f32 %v1824, %v1424
        %v1841 = vmul.f32 %v1825, %v1425
        %v1842 = vmul.f32 %v1826, %v1426
        %v1843 = vmul.f32 %v1827, %v1427
        %v1844 = vmul.f32 %v1828, %v1428
        %v1845 = vmul.f32 %v1829, %v1429
        %v1846 = vmul.f32 %v1830, %v1430
        %v1847 = vmul.f32 %v1831, %v1431
        %v1848 = vmul.f32 %v1832, %v1432
        %v1849 = vmul.f32 %v1833, %v1433
        %1850 = vst.msk [vmem:[%s376] sm:$0xff] %vm396, %v1834
        %1851 = vst.msk [vmem:[%s376 + $0x8] sm:$0xff] %vm396, %v1835
        %1852 = vst.msk [vmem:[%s376 + $0x10] sm:$0xff] %vm396, %v1836
        %1853 = vst.msk [vmem:[%s376 + $0x18] sm:$0xff] %vm396, %v1837
        %1854 = vst.msk [vmem:[%s376 + $0x20] sm:$0xff] %vm396, %v1838
        %1855 = vst.msk [vmem:[%s376 + $0x28] sm:$0xff] %vm396, %v1839
        %1856 = vst.msk [vmem:[%s376 + $0x30] sm:$0xff] %vm396, %v1840
        %1857 = vst.msk [vmem:[%s376 + $0x38] sm:$0xff] %vm396, %v1841
        %1858 = vst.msk [vmem:[%s376 + $0x40] sm:$0xff] %vm396, %v1842
        %1859 = vst.msk [vmem:[%s376 + $0x48] sm:$0xff] %vm396, %v1843
        %1860 = vst.msk [vmem:[%s376 + $0x50] sm:$0xff] %vm396, %v1844
        %1861 = vst.msk [vmem:[%s376 + $0x58] sm:$0xff] %vm396, %v1845
        %1862 = vst.msk [vmem:[%s376 + $0x60] sm:$0xff] %vm396, %v1846
        %1863 = vst.msk [vmem:[%s376 + $0x68] sm:$0xff] %vm396, %v1847
        %1864 = vst.msk [vmem:[%s376 + $0x70] sm:$0xff] %vm396, %v1848
        %1865 = vst.msk [vmem:[%s376 + $0x78] sm:$0xff] %vm396, %v1849
        %v1882 = vlaneseq
        %v1883 = vand.u32 %v1882, 127
        %v1884 = vperm.slane %v1418, %v1883
        %v1885 = vadd.s32 %v1883, 4294967288
        %v1886 = vperm.slane %v1419, %v1885
        %vm1887 = vcmask 130112
        %v1888 = vsel %vm1887, %v1886, %v1884
        %v1889 = vadd.s32 %v1883, 4294967280
        %v1890 = vperm.slane %v1420, %v1889
        %vm1891 = vcmask 195712
        %v1892 = vsel %vm1891, %v1890, %v1888
        %v1893 = vadd.s32 %v1883, 4294967272
        %v1894 = vperm.slane %v1421, %v1893
        %vm1895 = vcmask 261312
        %v1896 = vsel %vm1895, %v1894, %v1892
        %v1897 = vperm.slane %v1422, %v1883
        %v1898 = vperm.slane %v1423, %v1885
        %v1899 = vsel %vm1887, %v1898, %v1897
        %v1900 = vperm.slane %v1424, %v1889
        %v1901 = vsel %vm1891, %v1900, %v1899
        %v1902 = vperm.slane %v1425, %v1893
        %v1903 = vsel %vm1895, %v1902, %v1901
        %v1904 = vperm.slane %v1426, %v1883
        %v1905 = vperm.slane %v1427, %v1885
        %v1906 = vsel %vm1887, %v1905, %v1904
        %v1907 = vperm.slane %v1428, %v1889
        %v1908 = vsel %vm1891, %v1907, %v1906
        %v1909 = vperm.slane %v1429, %v1893
        %v1910 = vsel %vm1895, %v1909, %v1908
        %v1911 = vperm.slane %v1430, %v1883
        %v1912 = vperm.slane %v1431, %v1885
        %v1913 = vsel %vm1887, %v1912, %v1911
        %v1914 = vperm.slane %v1432, %v1889
        %v1915 = vsel %vm1891, %v1914, %v1913
        %v1916 = vperm.slane %v1433, %v1893
        %v1917 = vsel %vm1895, %v1916, %v1915
        %vm1918 = vcmask 1041409
        %v1919 = vsel %vm1918, %v1903, %v1896
        %vm1920 = vcmask 1042434
        %v1921 = vsel %vm1920, %v1910, %v1919
        %vm1922 = vcmask 1043459
        %v1923 = vsel %vm1922, %v1917, %v1921
        %vm1925 = vcmask 257024
        %1926 = vst.msk [vmem:[%s322] sm:$0xf] %vm1925, %v1923
        %v1943 = vperm.slane %v1722, %v1883
        %v1944 = vperm.slane %v1723, %v1885
        %v1945 = vsel %vm1887, %v1944, %v1943
        %v1946 = vperm.slane %v1724, %v1889
        %v1947 = vsel %vm1891, %v1946, %v1945
        %v1948 = vperm.slane %v1725, %v1893
        %v1949 = vsel %vm1895, %v1948, %v1947
        %v1950 = vperm.slane %v1726, %v1883
        %v1951 = vperm.slane %v1727, %v1885
        %v1952 = vsel %vm1887, %v1951, %v1950
        %v1953 = vperm.slane %v1728, %v1889
        %v1954 = vsel %vm1891, %v1953, %v1952
        %v1955 = vperm.slane %v1729, %v1893
        %v1956 = vsel %vm1895, %v1955, %v1954
        %v1957 = vperm.slane %v1730, %v1883
        %v1958 = vperm.slane %v1731, %v1885
        %v1959 = vsel %vm1887, %v1958, %v1957
        %v1960 = vperm.slane %v1732, %v1889
        %v1961 = vsel %vm1891, %v1960, %v1959
        %v1962 = vperm.slane %v1733, %v1893
        %v1963 = vsel %vm1895, %v1962, %v1961
        %v1964 = vperm.slane %v1734, %v1883
        %v1965 = vperm.slane %v1735, %v1885
        %v1966 = vsel %vm1887, %v1965, %v1964
        %v1967 = vperm.slane %v1736, %v1889
        %v1968 = vsel %vm1891, %v1967, %v1966
        %v1969 = vperm.slane %v1737, %v1893
        %v1970 = vsel %vm1895, %v1969, %v1968
        %v1971 = vsel %vm1918, %v1956, %v1949
        %v1972 = vsel %vm1920, %v1963, %v1971
        %v1973 = vsel %vm1922, %v1970, %v1972
        %1975 = vst.msk [vmem:[%s329] sm:$0xf] %vm1925, %v1973
        %v1992 = vperm.slane %v551, %v1883
        %v1993 = vperm.slane %v552, %v1885
        %v1994 = vsel %vm1887, %v1993, %v1992
        %v1995 = vperm.slane %v553, %v1889
        %v1996 = vsel %vm1891, %v1995, %v1994
        %v1997 = vperm.slane %v554, %v1893
        %v1998 = vsel %vm1895, %v1997, %v1996
        %v1999 = vperm.slane %v555, %v1883
        %v2000 = vperm.slane %v556, %v1885
        %v2001 = vsel %vm1887, %v2000, %v1999
        %v2002 = vperm.slane %v557, %v1889
        %v2003 = vsel %vm1891, %v2002, %v2001
        %v2004 = vperm.slane %v558, %v1893
        %v2005 = vsel %vm1895, %v2004, %v2003
        %v2006 = vperm.slane %v559, %v1883
        %v2007 = vperm.slane %v560, %v1885
        %v2008 = vsel %vm1887, %v2007, %v2006
        %v2009 = vperm.slane %v561, %v1889
        %v2010 = vsel %vm1891, %v2009, %v2008
        %v2011 = vperm.slane %v562, %v1893
        %v2012 = vsel %vm1895, %v2011, %v2010
        %v2013 = vperm.slane %v563, %v1883
        %v2014 = vperm.slane %v564, %v1885
        %v2015 = vsel %vm1887, %v2014, %v2013
        %v2016 = vperm.slane %v565, %v1889
        %v2017 = vsel %vm1891, %v2016, %v2015
        %v2018 = vperm.slane %v566, %v1893
        %v2019 = vsel %vm1895, %v2018, %v2017
        %v2020 = vsel %vm1918, %v2005, %v1998
        %v2021 = vsel %vm1920, %v2012, %v2020
        %v2022 = vsel %vm1922, %v2019, %v2021
        %2024 = vst.msk [vmem:[%s336] sm:$0xf] %vm1925, %v2022
        %s2025 = smul.u32 4, %s29
        %s2026 = smul.u32 4, %s30
        %p2027 = scmp.lt.s32.totalorder %s28, 1
        %s2028 = scalar_select %p2027, %s28, 1
        %p2029 = scmp.lt.s32.totalorder %s2025, 3
        %s2030 = scalar_select %p2029, %s2025, 3
        %p2031 = scmp.lt.s32.totalorder %s2026, 3
        %s2032 = scalar_select %p2031, %s2026, 3
        %s2033 = smul.addr %s2030, 4
        %s2034 = sadd.s32 %s2032, %s2033
        %s2035 = smul.addr %s2028, 16
        %s2036 = sadd.s32 %s2034, %s2035
        %s2037 = smul.addr %s2036, 8
        %s2038 = scalar_lea.vmem %s2, %s2037
        %s2039 = sand.u32 %s142, 1
        %s2040 = scalar_lea.sflag [#allocation3], %s2039
        %s2041 = sand.u32 %s142, 1
        %s2042 = smul.addr %s2041, 4
        %s2043 = scalar_lea.vmem [#allocation2], %s2042
        %s2044 = sand.u32 %s23, 1
        %s2045 = scalar_lea.sflag [#allocation5], %s2044
        %s2046 = sand.u32 %s172, 1
        %s2047 = smul.addr %s2046, 4
        %s2048 = scalar_lea.vmem [#allocation4], %s2047
        %s2049 = sand.u32 %s23, 1
        %s2050 = scalar_lea.sflag [#allocation5], %s2049
        %s2051 = sand.u32 %s202, 1
        %s2052 = smul.addr %s2051, 4
        %s2053 = scalar_lea.vmem [#allocation6], %s2052
        // Predicated region
        $region36: #{tpu_custom_call.1} parent=27 // pred_check
          %p2054 = pneg %p122
        $region37: #{tpu_custom_call.1} parent=27 // pred_check_branch
          %2056 = sbr.rel (%p2054) target = $region39
        $region38: #{tpu_custom_call.1} parent=27 // pred_region
          %s2057 = smul.u32 4, %s29
          %s2058 = smul.u32 4, %s30
        $region39: #{tpu_custom_call.1} parent=27 // pred_fallthru
          _
        // Predicated region
        $region40: #{tpu_custom_call.1} parent=27 // pred_check
          %p2059 = pneg %p152
        $region41: #{tpu_custom_call.1} parent=27 // pred_check_branch
          %2061 = sbr.rel (%p2059) target = $region43
        $region42: #{tpu_custom_call.1} parent=27 // pred_region
          %2063 = vsyncadd %s2040, 0
          %s2064 = sadd.s32 %s30, %s29
          %s2065 = sadd.s32 %s2064, %s28
          %s2066 = smul.addr %s2065, 4
          %s2067 = scalar_lea.hbm %s3, %s2066
          %s2069 = sshll.u32 %s2043, 4
          %s2070 = int_to_ptr.vmem [resolvable:$true] %s2069
          %s2071 = sshll.u32 %s2067, 4
          %s2072 = int_to_ptr.hbm [resolvable:$true] %s2071
          %2074 = dma.vmem_to_hbm [thread:$0]  %s2070, 64, %s2072, %s2040
        $region43: #{tpu_custom_call.1} parent=27 // pred_fallthru
          _
        // Predicated region
        $region44: #{tpu_custom_call.1} parent=27 // pred_check
          %p2075 = pneg %p182
        $region45: #{tpu_custom_call.1} parent=27 // pred_check_branch
          %2077 = sbr.rel (%p2075) target = $region47
        $region46: #{tpu_custom_call.1} parent=27 // pred_region
          %2079 = vsyncadd %s2045, 0
          %s2080 = sadd.s32 %s30, %s29
          %s2081 = sadd.s32 %s2080, %s28
          %s2082 = smul.addr %s2081, 4
          %s2083 = scalar_lea.hbm %s4, %s2082
          %s2085 = sshll.u32 %s2048, 4
          %s2086 = int_to_ptr.vmem [resolvable:$true] %s2085
          %s2087 = sshll.u32 %s2083, 4
          %s2088 = int_to_ptr.hbm [resolvable:$true] %s2087
          %2090 = dma.vmem_to_hbm [thread:$0]  %s2086, 64, %s2088, %s2045
        $region47: #{tpu_custom_call.1} parent=27 // pred_fallthru
          _
        // Predicated region
        $region48: #{tpu_custom_call.1} parent=27 // pred_check
          %p2091 = pneg %p212
        $region49: #{tpu_custom_call.1} parent=27 // pred_check_branch
          %2093 = sbr.rel (%p2091) target = $region51
        $region50: #{tpu_custom_call.1} parent=27 // pred_region
          %2095 = vsyncadd %s2050, 0
          %s2096 = sadd.s32 %s30, %s29
          %s2097 = sadd.s32 %s2096, %s28
          %s2098 = smul.addr %s2097, 4
          %s2099 = scalar_lea.hbm %s5, %s2098
          %s2101 = sshll.u32 %s2053, 4
          %s2102 = int_to_ptr.vmem [resolvable:$true] %s2101
          %s2103 = sshll.u32 %s2099, 4
          %s2104 = int_to_ptr.hbm [resolvable:$true] %s2103
          %2106 = dma.vmem_to_hbm [thread:$0]  %s2102, 64, %s2104, %s2050
        $region51: #{tpu_custom_call.1} parent=27 // pred_fallthru
          _
      $region28: #{tpu_custom_call.1} parent=5 // pred_fallthru
        _
      %p2107 = scmp.le.s32.totalorder 2, %s18
      // Predicated region
      $region52: #{tpu_custom_call.1} parent=5 // pred_check
        %p2108 = pneg %p2107
      $region53: #{tpu_custom_call.1} parent=5 // pred_check_branch
        %2110 = sbr.rel (%p2108) target = $region55
      $region54: #{tpu_custom_call.1} parent=5 // pred_region
        %s2111 = ssub.s32 %s18, 2
        // Predicated region
        $region56: #{tpu_custom_call.1} parent=54 // pred_check
          %p2112 = pneg %p128
        $region57: #{tpu_custom_call.1} parent=54 // pred_check_branch
          %2114 = sbr.rel (%p2112) target = $region59
        $region58: #{tpu_custom_call.1} parent=54 // pred_region
          %s2115 = smul.u32 4, %s32
          %s2116 = smul.u32 4, %s33
          %p2117 = scmp.lt.s32.totalorder %s31, 1
          %s2118 = scalar_select %p2117, %s31, 1
          %p2119 = scmp.lt.s32.totalorder %s2115, 3
          %s2120 = scalar_select %p2119, %s2115, 3
          %p2121 = scmp.lt.s32.totalorder %s2116, 3
          %s2122 = scalar_select %p2121, %s2116, 3
          %s2123 = smul.addr %s2120, 4
          %s2124 = sadd.s32 %s2122, %s2123
          %s2125 = smul.addr %s2118, 16
          %s2126 = sadd.s32 %s2124, %s2125
          %s2127 = smul.addr %s2126, 8
          %s2128 = scalar_lea.vmem %s2, %s2127
        $region59: #{tpu_custom_call.1} parent=54 // pred_fallthru
          _
        // Predicated region
        $region60: #{tpu_custom_call.1} parent=54 // pred_check
          %p2129 = pneg %p158
        $region61: #{tpu_custom_call.1} parent=54 // pred_check_branch
          %2131 = sbr.rel (%p2129) target = $region63
        $region62: #{tpu_custom_call.1} parent=54 // pred_region
          %s2132 = sand.u32 %s143, 1
          %s2133 = scalar_lea.sflag [#allocation3], %s2132
          %s2134 = sand.u32 %s143, 1
          %s2135 = smul.addr %s2134, 4
          %s2136 = scalar_lea.vmem [#allocation2], %s2135
          %2138 = dma.done %s2133, 64
        $region63: #{tpu_custom_call.1} parent=54 // pred_fallthru
          _
        // Predicated region
        $region64: #{tpu_custom_call.1} parent=54 // pred_check
          %p2139 = pneg %p188
        $region65: #{tpu_custom_call.1} parent=54 // pred_check_branch
          %2141 = sbr.rel (%p2139) target = $region67
        $region66: #{tpu_custom_call.1} parent=54 // pred_region
          %s2142 = sand.u32 %s24, 1
          %s2143 = scalar_lea.sflag [#allocation5], %s2142
          %s2144 = sand.u32 %s173, 1
          %s2145 = smul.addr %s2144, 4
          %s2146 = scalar_lea.vmem [#allocation4], %s2145
          %2148 = dma.done %s2143, 64
        $region67: #{tpu_custom_call.1} parent=54 // pred_fallthru
          _
        // Predicated region
        $region68: #{tpu_custom_call.1} parent=54 // pred_check
          %p2149 = pneg %p218
        $region69: #{tpu_custom_call.1} parent=54 // pred_check_branch
          %2151 = sbr.rel (%p2149) target = $region71
        $region70: #{tpu_custom_call.1} parent=54 // pred_region
          %s2152 = sand.u32 %s24, 1
          %s2153 = scalar_lea.sflag [#allocation5], %s2152
          %s2154 = sand.u32 %s203, 1
          %s2155 = smul.addr %s2154, 4
          %s2156 = scalar_lea.vmem [#allocation6], %s2155
          %2158 = dma.done %s2153, 64
        $region71: #{tpu_custom_call.1} parent=54 // pred_fallthru
          _
      $region55: #{tpu_custom_call.1} parent=5 // pred_fallthru
        _
    $region6: #{tpu_custom_call.1} parent=1 // loop_footer
      %s22 = sadd.s32 1, %s18
    $region7: #{tpu_custom_call.1} parent=1 // loop_footer_branch
      %17 = sbr.rel target = $region3
    $region8: #{tpu_custom_call.1} parent=1 // loop_exit
      _
    %2159 = vsyncpa [#allocation3], 1
    %s2160 = scalar_lea.sflag [#allocation3], 1
    %2161 = vsyncpa %s2160, 1
    %2162 = vsyncpa [#allocation5], 1
    %s2163 = scalar_lea.sflag [#allocation5], 1
    %2164 = vsyncpa %s2163, 1

</llo_original>
